<compile_context>
chip_gen: v6e
topology: v6e:2x2x1
jax: 0.10.0
libtpu: 0.0.40
codegen_flags: <defaults>
</compile_context>

<pallas_src>
import functools

import jax
import jax.numpy as jnp
from jax import lax
from jax.experimental import pallas as pl
from jax.experimental.pallas import tpu as pltpu


# ---------------------------------------------------------------------------
# Shared attention math (traced inside the fused kernel; all tiles in VMEM).
# The softmax scale is already folded into q by the caller/init.
# ---------------------------------------------------------------------------
def _sdpa(q, k, v):
    """Single-head attention on 2-D tiles. q:[Tq,D] k:[Tk,D] v:[Tk,Dv] -> [Tq,Dv] f32."""
    s = lax.dot_general(q.astype(jnp.bfloat16), k.astype(jnp.bfloat16),
                        (((1,), (1,)), ((), ())),
                        preferred_element_type=jnp.float32)          # [Tq, Tk]
    m = jnp.max(s, axis=-1, keepdims=True)
    p = jnp.exp(s - m)
    l = jnp.sum(p, axis=-1, keepdims=True)
    o = jnp.dot(p.astype(jnp.bfloat16), v.astype(jnp.bfloat16),
                preferred_element_type=jnp.float32)                   # [Tq, Dv]
    return o * pl.reciprocal(l, approx=True)


# ---------------------------------------------------------------------------
# Fully fused encoder -> (processor + decoder) x T_out kernel.  grid = (B,).
# ---------------------------------------------------------------------------
def _epd_kernel(x_ref, eq_ref, ewkv_ref, ebkv_ref, ewo_ref, ebo_ref,
                pwqkv_ref, pbqkv_ref, pwo_ref, pbo_ref,
                dq_ref, dwq_ref, dbq_ref, dwkv_ref, dbkv_ref, dwo_ref, dbo_ref,
                out_ref, *, t_out):
    d = ewo_ref.shape[0]
    d_out = dwo_ref.shape[1]

    # --- encoder: cross-attention(learned latents <- inputs) -------------
    # (latent Q projection precomputed + pre-scaled at init: eq_ref)
    kv = (jnp.dot(x_ref[0].astype(jnp.bfloat16), ewkv_ref[...],
                  preferred_element_type=jnp.float32) + ebkv_ref[...])      # [M, 2D]
    a = _sdpa(eq_ref[...], kv[:, :d], kv[:, d:])                            # [N_LAT, D]
    z = (jnp.dot(a.astype(jnp.bfloat16), ewo_ref[...],
                 preferred_element_type=jnp.float32) + ebo_ref[...])        # [N_LAT, D]

    # --- decoder query projection: invariant across T_out, compute once --
    qd = (jnp.dot(dq_ref[0].astype(jnp.bfloat16), dwq_ref[...],
                  preferred_element_type=jnp.float32) + dbq_ref[...])       # [NQ, D]

    # --- T_out trajectory loop: static, fully unrolled in-kernel ---------
    for t in range(t_out):
        # processor: self-attention on z (fused QKV, scale folded into Q) + residual
        qkv = (jnp.dot(z.astype(jnp.bfloat16), pwqkv_ref[...],
                       preferred_element_type=jnp.float32) + pbqkv_ref[...])  # [N_LAT, 3D]
        a = _sdpa(qkv[:, :d], qkv[:, d:2 * d], qkv[:, 2 * d:])
        z = z + (jnp.dot(a.astype(jnp.bfloat16), pwo_ref[...],
                         preferred_element_type=jnp.float32) + pbo_ref[...])

        # decoder: cross-attention(query <- z) + output projection
        kvd = (jnp.dot(z.astype(jnp.bfloat16), dwkv_ref[...],
                       preferred_element_type=jnp.float32) + dbkv_ref[...])   # [N_LAT, 2D]
        ad = _sdpa(qd, kvd[:, :d], kvd[:, d:])                                # [NQ, D]
        out_t = (jnp.dot(ad.astype(jnp.bfloat16), dwo_ref[...],
                         preferred_element_type=jnp.float32) + dbo_ref[...])  # [NQ, D_OUT]
        # static column slice of the resident [NQ, T_out*D_OUT] output slab
        # (torch.cat(trajectory, dim=-1) layout); one dense HBM writeback per batch row.
        out_ref[0, :, t * d_out:(t + 1) * d_out] = out_t.astype(out_ref.dtype)


# ---------------------------------------------------------------------------
# EncoderProcessorDecoder.forward
# ---------------------------------------------------------------------------
def epd_forward(params, inputs, decoder_query=None, T_out=None):
    # TODO(synk): input_preprocessor / output_postprocessor are None in this
    # synthetic setup (identity), matching the default PyTorch constructor args.
    x = inputs[..., :132]          # == permute(2,0,1)[:132].permute(1,2,0)
    b, m, c = x.shape
    n_lat, d = params["enc_q"].shape
    d_out = params["dec_wo"].shape[1]
    steps = T_out if T_out is not None else 1

    if decoder_query is None:
        query = params["dec_default_query"]            # [1, NQ, DQ] learned default
    else:
        query = decoder_query                          # [B, NQ, DQ]
    _, nq, dq = query.shape
    # broadcast the learned default query over batch via the index_map
    q_map = (lambda i: (0, 0, 0)) if query.shape[0] == 1 else (lambda i: (i, 0, 0))

    kern = functools.partial(_epd_kernel, t_out=steps)
    # Constant index_maps keep every weight VMEM-resident across the batch grid.
    # NOTE(v7x): at realistic IPOT sizes, single-buffer the constant weights and
    # tile the encoder over M; at these shapes everything fits comfortably.
    out = pl.pallas_call(
        kern,
        out_shape=jax.ShapeDtypeStruct((b, nq, steps * d_out), jnp.float32),
        grid=(b,),
        in_specs=[
            pl.BlockSpec((1, m, c), lambda i: (i, 0, 0)),      # x           [B, M, C']
            pl.BlockSpec((n_lat, d), lambda i: (0, 0)),        # enc_q (precomputed, scaled)
            pl.BlockSpec((c, 2 * d), lambda i: (0, 0)),        # enc_wkv (fused K|V)
            pl.BlockSpec((1, 2 * d), lambda i: (0, 0)),        # enc_bkv
            pl.BlockSpec((d, d), lambda i: (0, 0)),            # enc_wo
            pl.BlockSpec((1, d), lambda i: (0, 0)),            # enc_bo
            pl.BlockSpec((d, 3 * d), lambda i: (0, 0)),        # proc_wqkv (fused, Q scaled)
            pl.BlockSpec((1, 3 * d), lambda i: (0, 0)),        # proc_bqkv
            pl.BlockSpec((d, d), lambda i: (0, 0)),            # proc_wo
            pl.BlockSpec((1, d), lambda i: (0, 0)),            # proc_bo
            pl.BlockSpec((1, nq, dq), q_map),                  # decoder query
            pl.BlockSpec((dq, d), lambda i: (0, 0)),           # dec_wq (scaled)
            pl.BlockSpec((1, d), lambda i: (0, 0)),            # dec_bq (scaled)
            pl.BlockSpec((d, 2 * d), lambda i: (0, 0)),        # dec_wkv (fused K|V)
            pl.BlockSpec((1, 2 * d), lambda i: (0, 0)),        # dec_bkv
            pl.BlockSpec((d, d_out), lambda i: (0, 0)),        # dec_wo
            pl.BlockSpec((1, d_out), lambda i: (0, 0)),        # dec_bo
        ],
        out_specs=pl.BlockSpec((1, nq, steps * d_out), lambda i: (i, 0, 0)),
        compiler_params=pltpu.CompilerParams(
            dimension_semantics=("parallel",),
            vmem_limit_bytes=48 * 1024 * 1024),
    )(x, params["enc_q"],
      params["enc_wkv"], params["enc_bkv"], params["enc_wo"], params["enc_bo"],
      params["proc_wqkv"], params["proc_bqkv"], params["proc_wo"], params["proc_bo"],
      query, params["dec_wq"], params["dec_bq"],
      params["dec_wkv"], params["dec_bkv"], params["dec_wo"], params["dec_bo"])
    # Output already has the torch.cat(trajectory, dim=-1) layout: [B, NQ, steps*D_OUT].
    return out


# ---------------------------------------------------------------------------
# Deterministic parameter init.  Weights stored in bf16, biases / latents f32.
# Batch-invariant & scale folding is done here, offline:
#   * enc_q = (enc_latents @ enc_wq + enc_bq) * (1/sqrt(D))  (precomputed)
#   * 1/sqrt(D) is folded ONLY into the Q-side projections
#     (dec_wq/dec_bq and the Q slice of proc_wqkv/proc_bqkv), never into K.
# ---------------------------------------------------------------------------
def init_params(key, c_in, d, n_lat, dq, n_q_default, d_out):
    ks = jax.random.split(key, 10)
    s = 0.02
    scale = jnp.float32(1.0 / (d ** 0.5))

    def w32(k, shape):
        return s * jax.random.normal(k, shape, jnp.float32)

    def zb(n):
        return jnp.zeros((1, n), jnp.float32)

    # encoder: cross-attention(latents <- inputs)
    latents = w32(ks[0], (n_lat, d))
    enc_wq, enc_bq = w32(ks[1], (d, d)), zb(d)
    enc_q = (latents @ enc_wq + enc_bq) * scale          # precomputed, pre-scaled

    # processor: self-attention on latents (+ residual), fused QKV; Q slice scaled
    proc_wqkv = w32(ks[4], (d, 3 * d)).at[:, :d].multiply(scale)
    proc_bqkv = zb(3 * d).at[:, :d].multiply(scale)

    # decoder: cross-attention(query <- latents) + output projection; Q scaled
    dec_wq = w32(ks[7], (dq, d)) * scale
    dec_bq = zb(d) * scale

    return dict(
        enc_q=enc_q,
        enc_wkv=w32(ks[2], (c_in, 2 * d)).astype(jnp.bfloat16), enc_bkv=zb(2 * d),
        enc_wo=w32(ks[3], (d, d)).astype(jnp.bfloat16), enc_bo=zb(d),
        proc_wqkv=proc_wqkv.astype(jnp.bfloat16), proc_bqkv=proc_bqkv,
        proc_wo=w32(ks[5], (d, d)).astype(jnp.bfloat16), proc_bo=zb(d),
        dec_default_query=w32(ks[6], (1, n_q_default, dq)),
        dec_wq=dec_wq.astype(jnp.bfloat16), dec_bq=dec_bq,
        dec_wkv=w32(ks[8], (d, 2 * d)).astype(jnp.bfloat16), dec_bkv=zb(2 * d),
        dec_wo=w32(ks[9], (d, d_out)).astype(jnp.bfloat16), dec_bo=zb(d_out),
    )


# ---------------------------------------------------------------------------
if __name__ == "__main__":
    key = jax.random.PRNGKey(0)
    B, M, C = 2, 16, 8           # inputs  [B, M, C]  (C < 132 -> truncation is a no-op)
    D, N_LAT = 64, 8             # latent dim (2D=128 lane-dense KV), number of latents
    DQ, NQ, D_OUT = 16, 8, 4     # decoder query dim / tokens, output channels

    k0, k1, k2 = jax.random.split(key, 3)
    inputs = jax.random.normal(k0, (B, M, C), jnp.float32)
    dec_query = jax.random.normal(k1, (B, NQ, DQ), jnp.float32)
    params = init_params(k2, min(C, 132), D, N_LAT, DQ, NQ, D_OUT)

    out_single = epd_forward(params, inputs, decoder_query=dec_query)            # T_out=None
    out_traj = epd_forward(params, inputs, decoder_query=dec_query, T_out=3)     # trajectory
    out_noq = epd_forward(params, inputs)           # decoder(z=z) path (learned default query)

    jax.block_until_ready((out_single, out_traj, out_noq))
    assert out_single.shape == (B, NQ, D_OUT)
    assert out_traj.shape == (B, NQ, 3 * D_OUT)     # torch.cat(trajectory, dim=-1)
    assert out_noq.shape == (B, NQ, D_OUT)
    assert bool(jnp.all(jnp.isfinite(out_traj)))
    print("KERNEL_OK")
</pallas_src>

<mosaic_0001>
module attributes {stable_mosaic.version = 11 : i64} {
  func.func @_epd_kernel(%arg0: i32, %arg1: memref<1x16x8xf32, #tpu.memory_space<vmem>>, %arg2: memref<8x64xf32, #tpu.memory_space<vmem>>, %arg3: memref<8x128xbf16, #tpu.memory_space<vmem>>, %arg4: memref<1x128xf32, #tpu.memory_space<vmem>>, %arg5: memref<64x64xbf16, #tpu.memory_space<vmem>>, %arg6: memref<1x64xf32, #tpu.memory_space<vmem>>, %arg7: memref<64x192xbf16, #tpu.memory_space<vmem>>, %arg8: memref<1x192xf32, #tpu.memory_space<vmem>>, %arg9: memref<64x64xbf16, #tpu.memory_space<vmem>>, %arg10: memref<1x64xf32, #tpu.memory_space<vmem>>, %arg11: memref<1x8x16xf32, #tpu.memory_space<vmem>>, %arg12: memref<16x64xbf16, #tpu.memory_space<vmem>>, %arg13: memref<1x64xf32, #tpu.memory_space<vmem>>, %arg14: memref<64x128xbf16, #tpu.memory_space<vmem>>, %arg15: memref<1x128xf32, #tpu.memory_space<vmem>>, %arg16: memref<64x4xbf16, #tpu.memory_space<vmem>>, %arg17: memref<1x4xf32, #tpu.memory_space<vmem>>, %arg18: memref<1x8x4xf32, #tpu.memory_space<vmem>>) attributes {dimension_semantics = [#tpu.dimension_semantics<parallel>], iteration_bounds = array<i64: 2>, scalar_prefetch = 0 : i64, scratch_operands = 0 : i64, tpu.core_type = #tpu.core_type<tc>, window_params = [{transform_indices = @transform_0, window_bounds = array<i64: 1, 16, 8>}, {pipeline_mode = #tpu.pipeline_mode<synchronous>, transform_indices = @transform_1, window_bounds = array<i64: 8, 64>}, {pipeline_mode = #tpu.pipeline_mode<synchronous>, transform_indices = @transform_2, window_bounds = array<i64: 8, 128>}, {pipeline_mode = #tpu.pipeline_mode<synchronous>, transform_indices = @transform_3, window_bounds = array<i64: 1, 128>}, {pipeline_mode = #tpu.pipeline_mode<synchronous>, transform_indices = @transform_4, window_bounds = array<i64: 64, 64>}, {pipeline_mode = #tpu.pipeline_mode<synchronous>, transform_indices = @transform_5, window_bounds = array<i64: 1, 64>}, {pipeline_mode = #tpu.pipeline_mode<synchronous>, transform_indices = @transform_6, window_bounds = array<i64: 64, 192>}, {pipeline_mode = #tpu.pipeline_mode<synchronous>, transform_indices = @transform_7, window_bounds = array<i64: 1, 192>}, {pipeline_mode = #tpu.pipeline_mode<synchronous>, transform_indices = @transform_8, window_bounds = array<i64: 64, 64>}, {pipeline_mode = #tpu.pipeline_mode<synchronous>, transform_indices = @transform_9, window_bounds = array<i64: 1, 64>}, {transform_indices = @transform_10, window_bounds = array<i64: 1, 8, 16>}, {pipeline_mode = #tpu.pipeline_mode<synchronous>, transform_indices = @transform_11, window_bounds = array<i64: 16, 64>}, {pipeline_mode = #tpu.pipeline_mode<synchronous>, transform_indices = @transform_12, window_bounds = array<i64: 1, 64>}, {pipeline_mode = #tpu.pipeline_mode<synchronous>, transform_indices = @transform_13, window_bounds = array<i64: 64, 128>}, {pipeline_mode = #tpu.pipeline_mode<synchronous>, transform_indices = @transform_14, window_bounds = array<i64: 1, 128>}, {pipeline_mode = #tpu.pipeline_mode<synchronous>, transform_indices = @transform_15, window_bounds = array<i64: 64, 4>}, {pipeline_mode = #tpu.pipeline_mode<synchronous>, transform_indices = @transform_16, window_bounds = array<i64: 1, 4>}, {transform_indices = @transform_17, window_bounds = array<i64: 1, 8, 4>}]} {
    %c0 = arith.constant 0 : index
    %c0_0 = arith.constant 0 : index
    %c0_1 = arith.constant 0 : index
    %0 = vector.load %arg1[%c0, %c0_0, %c0_1] : memref<1x16x8xf32, #tpu.memory_space<vmem>>, vector<1x16x8xf32>
    %1 = vector.shape_cast %0 : vector<1x16x8xf32> to vector<16x8xf32>
    %2 = arith.truncf %1 : vector<16x8xf32> to vector<16x8xbf16>
    %c0_2 = arith.constant 0 : index
    %c0_3 = arith.constant 0 : index
    %3 = vector.load %arg3[%c0_2, %c0_3] : memref<8x128xbf16, #tpu.memory_space<vmem>>, vector<8x128xbf16>
    %cst = arith.constant dense<0.000000e+00> : vector<16x128xf32>
    %4 = tpu.matmul %2, %3, %cst {dimension_numbers = #tpu.dot_dimension_numbers<[1], [0], [0], [1], [0, 0, 1, 1], [], []>} : vector<16x8xbf16>, vector<8x128xbf16>, vector<16x128xf32> -> vector<16x128xf32>
    %c0_4 = arith.constant 0 : index
    %c0_5 = arith.constant 0 : index
    %5 = vector.load %arg4[%c0_4, %c0_5] : memref<1x128xf32, #tpu.memory_space<vmem>>, vector<1x128xf32>
    %6 = vector.broadcast %5 : vector<1x128xf32> to vector<16x128xf32>
    %7 = arith.addf %4, %6 : vector<16x128xf32>
    %c0_6 = arith.constant 0 : index
    %c0_7 = arith.constant 0 : index
    %8 = vector.load %arg2[%c0_6, %c0_7] : memref<8x64xf32, #tpu.memory_space<vmem>>, vector<8x64xf32>
    %9 = vector.extract_strided_slice %7 {offsets = [0, 0], sizes = [16, 64], strides = [1, 1]} : vector<16x128xf32> to vector<16x64xf32>
    %10 = vector.extract_strided_slice %7 {offsets = [0, 64], sizes = [16, 64], strides = [1, 1]} : vector<16x128xf32> to vector<16x64xf32>
    %11 = arith.truncf %8 : vector<8x64xf32> to vector<8x64xbf16>
    %12 = arith.truncf %9 : vector<16x64xf32> to vector<16x64xbf16>
    %cst_8 = arith.constant dense<0.000000e+00> : vector<8x16xf32>
    %13 = tpu.matmul %11, %12, %cst_8 {dimension_numbers = #tpu.dot_dimension_numbers<[1], [1], [0], [0], [0, 0, 1, 0], [], []>} : vector<8x64xbf16>, vector<16x64xbf16>, vector<8x16xf32> -> vector<8x16xf32>
    %cst_9 = arith.constant dense<0xFF800000> : vector<8xf32>
    %14 = vector.multi_reduction <maximumf>, %13, %cst_9 [1] : vector<8x16xf32> to vector<8xf32>
    %15 = vector.shape_cast %14 : vector<8xf32> to vector<8x1xf32>
    %16 = vector.broadcast %15 : vector<8x1xf32> to vector<8x16xf32>
    %17 = arith.subf %13, %16 : vector<8x16xf32>
    %18 = math.exp %17 : vector<8x16xf32>
    %cst_10 = arith.constant dense<0.000000e+00> : vector<8xf32>
    %19 = vector.multi_reduction <add>, %18, %cst_10 [1] : vector<8x16xf32> to vector<8xf32>
    %20 = vector.shape_cast %19 : vector<8xf32> to vector<8x1xf32>
    %21 = arith.truncf %18 : vector<8x16xf32> to vector<8x16xbf16>
    %22 = arith.truncf %10 : vector<16x64xf32> to vector<16x64xbf16>
    %cst_11 = arith.constant dense<0.000000e+00> : vector<8x64xf32>
    %23 = tpu.matmul %21, %22, %cst_11 {dimension_numbers = #tpu.dot_dimension_numbers<[1], [0], [0], [1], [0, 0, 1, 1], [], []>} : vector<8x16xbf16>, vector<16x64xbf16>, vector<8x64xf32> -> vector<8x64xf32>
    %24 = tpu.reciprocal %20 {approx = true} : vector<8x1xf32> -> vector<8x1xf32>
    %25 = vector.broadcast %24 : vector<8x1xf32> to vector<8x64xf32>
    %26 = arith.mulf %23, %25 : vector<8x64xf32>
    %27 = arith.truncf %26 : vector<8x64xf32> to vector<8x64xbf16>
    %c0_12 = arith.constant 0 : index
    %c0_13 = arith.constant 0 : index
    %28 = vector.load %arg5[%c0_12, %c0_13] : memref<64x64xbf16, #tpu.memory_space<vmem>>, vector<64x64xbf16>
    %cst_14 = arith.constant dense<0.000000e+00> : vector<8x64xf32>
    %29 = tpu.matmul %27, %28, %cst_14 {dimension_numbers = #tpu.dot_dimension_numbers<[1], [0], [0], [1], [0, 0, 1, 1], [], []>} : vector<8x64xbf16>, vector<64x64xbf16>, vector<8x64xf32> -> vector<8x64xf32>
    %c0_15 = arith.constant 0 : index
    %c0_16 = arith.constant 0 : index
    %30 = vector.load %arg6[%c0_15, %c0_16] : memref<1x64xf32, #tpu.memory_space<vmem>>, vector<1x64xf32>
    %31 = vector.broadcast %30 : vector<1x64xf32> to vector<8x64xf32>
    %32 = arith.addf %29, %31 : vector<8x64xf32>
    %c0_17 = arith.constant 0 : index
    %c0_18 = arith.constant 0 : index
    %c0_19 = arith.constant 0 : index
    %33 = vector.load %arg11[%c0_17, %c0_18, %c0_19] : memref<1x8x16xf32, #tpu.memory_space<vmem>>, vector<1x8x16xf32>
    %34 = vector.shape_cast %33 : vector<1x8x16xf32> to vector<8x16xf32>
    %35 = arith.truncf %34 : vector<8x16xf32> to vector<8x16xbf16>
    %c0_20 = arith.constant 0 : index
    %c0_21 = arith.constant 0 : index
    %36 = vector.load %arg12[%c0_20, %c0_21] : memref<16x64xbf16, #tpu.memory_space<vmem>>, vector<16x64xbf16>
    %cst_22 = arith.constant dense<0.000000e+00> : vector<8x64xf32>
    %37 = tpu.matmul %35, %36, %cst_22 {dimension_numbers = #tpu.dot_dimension_numbers<[1], [0], [0], [1], [0, 0, 1, 1], [], []>} : vector<8x16xbf16>, vector<16x64xbf16>, vector<8x64xf32> -> vector<8x64xf32>
    %c0_23 = arith.constant 0 : index
    %c0_24 = arith.constant 0 : index
    %38 = vector.load %arg13[%c0_23, %c0_24] : memref<1x64xf32, #tpu.memory_space<vmem>>, vector<1x64xf32>
    %39 = vector.broadcast %38 : vector<1x64xf32> to vector<8x64xf32>
    %40 = arith.addf %37, %39 : vector<8x64xf32>
    %41 = arith.truncf %32 : vector<8x64xf32> to vector<8x64xbf16>
    %c0_25 = arith.constant 0 : index
    %c0_26 = arith.constant 0 : index
    %42 = vector.load %arg7[%c0_25, %c0_26] : memref<64x192xbf16, #tpu.memory_space<vmem>>, vector<64x192xbf16>
    %cst_27 = arith.constant dense<0.000000e+00> : vector<8x192xf32>
    %43 = tpu.matmul %41, %42, %cst_27 {dimension_numbers = #tpu.dot_dimension_numbers<[1], [0], [0], [1], [0, 0, 1, 1], [], []>} : vector<8x64xbf16>, vector<64x192xbf16>, vector<8x192xf32> -> vector<8x192xf32>
    %c0_28 = arith.constant 0 : index
    %c0_29 = arith.constant 0 : index
    %44 = vector.load %arg8[%c0_28, %c0_29] : memref<1x192xf32, #tpu.memory_space<vmem>>, vector<1x192xf32>
    %45 = vector.broadcast %44 : vector<1x192xf32> to vector<8x192xf32>
    %46 = arith.addf %43, %45 : vector<8x192xf32>
    %47 = vector.extract_strided_slice %46 {offsets = [0, 0], sizes = [8, 64], strides = [1, 1]} : vector<8x192xf32> to vector<8x64xf32>
    %48 = vector.extract_strided_slice %46 {offsets = [0, 64], sizes = [8, 64], strides = [1, 1]} : vector<8x192xf32> to vector<8x64xf32>
    %49 = vector.extract_strided_slice %46 {offsets = [0, 128], sizes = [8, 64], strides = [1, 1]} : vector<8x192xf32> to vector<8x64xf32>
    %50 = arith.truncf %47 : vector<8x64xf32> to vector<8x64xbf16>
    %51 = arith.truncf %48 : vector<8x64xf32> to vector<8x64xbf16>
    %cst_30 = arith.constant dense<0.000000e+00> : vector<8x8xf32>
    %52 = tpu.matmul %50, %51, %cst_30 {dimension_numbers = #tpu.dot_dimension_numbers<[1], [1], [0], [0], [0, 0, 1, 0], [], []>} : vector<8x64xbf16>, vector<8x64xbf16>, vector<8x8xf32> -> vector<8x8xf32>
    %cst_31 = arith.constant dense<0xFF800000> : vector<8xf32>
    %53 = vector.multi_reduction <maximumf>, %52, %cst_31 [1] : vector<8x8xf32> to vector<8xf32>
    %54 = vector.shape_cast %53 : vector<8xf32> to vector<8x1xf32>
    %55 = vector.broadcast %54 : vector<8x1xf32> to vector<8x8xf32>
    %56 = arith.subf %52, %55 : vector<8x8xf32>
    %57 = math.exp %56 : vector<8x8xf32>
    %cst_32 = arith.constant dense<0.000000e+00> : vector<8xf32>
    %58 = vector.multi_reduction <add>, %57, %cst_32 [1] : vector<8x8xf32> to vector<8xf32>
    %59 = vector.shape_cast %58 : vector<8xf32> to vector<8x1xf32>
    %60 = arith.truncf %57 : vector<8x8xf32> to vector<8x8xbf16>
    %61 = arith.truncf %49 : vector<8x64xf32> to vector<8x64xbf16>
    %cst_33 = arith.constant dense<0.000000e+00> : vector<8x64xf32>
    %62 = tpu.matmul %60, %61, %cst_33 {dimension_numbers = #tpu.dot_dimension_numbers<[1], [0], [0], [1], [0, 0, 1, 1], [], []>} : vector<8x8xbf16>, vector<8x64xbf16>, vector<8x64xf32> -> vector<8x64xf32>
    %63 = tpu.reciprocal %59 {approx = true} : vector<8x1xf32> -> vector<8x1xf32>
    %64 = vector.broadcast %63 : vector<8x1xf32> to vector<8x64xf32>
    %65 = arith.mulf %62, %64 : vector<8x64xf32>
    %66 = arith.truncf %65 : vector<8x64xf32> to vector<8x64xbf16>
    %c0_34 = arith.constant 0 : index
    %c0_35 = arith.constant 0 : index
    %67 = vector.load %arg9[%c0_34, %c0_35] : memref<64x64xbf16, #tpu.memory_space<vmem>>, vector<64x64xbf16>
    %cst_36 = arith.constant dense<0.000000e+00> : vector<8x64xf32>
    %68 = tpu.matmul %66, %67, %cst_36 {dimension_numbers = #tpu.dot_dimension_numbers<[1], [0], [0], [1], [0, 0, 1, 1], [], []>} : vector<8x64xbf16>, vector<64x64xbf16>, vector<8x64xf32> -> vector<8x64xf32>
    %c0_37 = arith.constant 0 : index
    %c0_38 = arith.constant 0 : index
    %69 = vector.load %arg10[%c0_37, %c0_38] : memref<1x64xf32, #tpu.memory_space<vmem>>, vector<1x64xf32>
    %70 = vector.broadcast %69 : vector<1x64xf32> to vector<8x64xf32>
    %71 = arith.addf %68, %70 : vector<8x64xf32>
    %72 = arith.addf %32, %71 : vector<8x64xf32>
    %73 = arith.truncf %72 : vector<8x64xf32> to vector<8x64xbf16>
    %c0_39 = arith.constant 0 : index
    %c0_40 = arith.constant 0 : index
    %74 = vector.load %arg14[%c0_39, %c0_40] : memref<64x128xbf16, #tpu.memory_space<vmem>>, vector<64x128xbf16>
    %cst_41 = arith.constant dense<0.000000e+00> : vector<8x128xf32>
    %75 = tpu.matmul %73, %74, %cst_41 {dimension_numbers = #tpu.dot_dimension_numbers<[1], [0], [0], [1], [0, 0, 1, 1], [], []>} : vector<8x64xbf16>, vector<64x128xbf16>, vector<8x128xf32> -> vector<8x128xf32>
    %c0_42 = arith.constant 0 : index
    %c0_43 = arith.constant 0 : index
    %76 = vector.load %arg15[%c0_42, %c0_43] : memref<1x128xf32, #tpu.memory_space<vmem>>, vector<1x128xf32>
    %77 = vector.broadcast %76 : vector<1x128xf32> to vector<8x128xf32>
    %78 = arith.addf %75, %77 : vector<8x128xf32>
    %79 = vector.extract_strided_slice %78 {offsets = [0, 0], sizes = [8, 64], strides = [1, 1]} : vector<8x128xf32> to vector<8x64xf32>
    %80 = vector.extract_strided_slice %78 {offsets = [0, 64], sizes = [8, 64], strides = [1, 1]} : vector<8x128xf32> to vector<8x64xf32>
    %81 = arith.truncf %40 : vector<8x64xf32> to vector<8x64xbf16>
    %82 = arith.truncf %79 : vector<8x64xf32> to vector<8x64xbf16>
    %cst_44 = arith.constant dense<0.000000e+00> : vector<8x8xf32>
    %83 = tpu.matmul %81, %82, %cst_44 {dimension_numbers = #tpu.dot_dimension_numbers<[1], [1], [0], [0], [0, 0, 1, 0], [], []>} : vector<8x64xbf16>, vector<8x64xbf16>, vector<8x8xf32> -> vector<8x8xf32>
    %cst_45 = arith.constant dense<0xFF800000> : vector<8xf32>
    %84 = vector.multi_reduction <maximumf>, %83, %cst_45 [1] : vector<8x8xf32> to vector<8xf32>
    %85 = vector.shape_cast %84 : vector<8xf32> to vector<8x1xf32>
    %86 = vector.broadcast %85 : vector<8x1xf32> to vector<8x8xf32>
    %87 = arith.subf %83, %86 : vector<8x8xf32>
    %88 = math.exp %87 : vector<8x8xf32>
    %cst_46 = arith.constant dense<0.000000e+00> : vector<8xf32>
    %89 = vector.multi_reduction <add>, %88, %cst_46 [1] : vector<8x8xf32> to vector<8xf32>
    %90 = vector.shape_cast %89 : vector<8xf32> to vector<8x1xf32>
    %91 = arith.truncf %88 : vector<8x8xf32> to vector<8x8xbf16>
    %92 = arith.truncf %80 : vector<8x64xf32> to vector<8x64xbf16>
    %cst_47 = arith.constant dense<0.000000e+00> : vector<8x64xf32>
    %93 = tpu.matmul %91, %92, %cst_47 {dimension_numbers = #tpu.dot_dimension_numbers<[1], [0], [0], [1], [0, 0, 1, 1], [], []>} : vector<8x8xbf16>, vector<8x64xbf16>, vector<8x64xf32> -> vector<8x64xf32>
    %94 = tpu.reciprocal %90 {approx = true} : vector<8x1xf32> -> vector<8x1xf32>
    %95 = vector.broadcast %94 : vector<8x1xf32> to vector<8x64xf32>
    %96 = arith.mulf %93, %95 : vector<8x64xf32>
    %97 = arith.truncf %96 : vector<8x64xf32> to vector<8x64xbf16>
    %c0_48 = arith.constant 0 : index
    %c0_49 = arith.constant 0 : index
    %98 = vector.load %arg16[%c0_48, %c0_49] : memref<64x4xbf16, #tpu.memory_space<vmem>>, vector<64x4xbf16>
    %cst_50 = arith.constant dense<0.000000e+00> : vector<8x4xf32>
    %99 = tpu.matmul %97, %98, %cst_50 {dimension_numbers = #tpu.dot_dimension_numbers<[1], [0], [0], [1], [0, 0, 1, 1], [], []>} : vector<8x64xbf16>, vector<64x4xbf16>, vector<8x4xf32> -> vector<8x4xf32>
    %c0_51 = arith.constant 0 : index
    %c0_52 = arith.constant 0 : index
    %100 = vector.load %arg17[%c0_51, %c0_52] : memref<1x4xf32, #tpu.memory_space<vmem>>, vector<1x4xf32>
    %101 = vector.broadcast %100 : vector<1x4xf32> to vector<8x4xf32>
    %102 = arith.addf %99, %101 : vector<8x4xf32>
    %c0_53 = arith.constant 0 : index
    %c0_54 = arith.constant 0 : index
    %c0_55 = arith.constant 0 : index
    %103 = vector.load %arg18[%c0_53, %c0_54, %c0_55] : memref<1x8x4xf32, #tpu.memory_space<vmem>>, vector<1x8x4xf32>
    %104 = vector.shape_cast %103 : vector<1x8x4xf32> to vector<8x4xf32>
    %105 = vector.shape_cast %102 : vector<8x4xf32> to vector<1x8x4xf32>
    tpu.vector_store %arg18[%c0_53, %c0_54, %c0_55], %105 {strides = array<i32>} : memref<1x8x4xf32, #tpu.memory_space<vmem>>, vector<1x8x4xf32>,
    return
  }
  func.func @transform_0(%arg0: i32) -> (i32, i32, i32) {
    %c0_i32 = arith.constant 0 : i32
    %c0_i32_0 = arith.constant 0 : i32
    %c0_i32_1 = arith.constant 0 : i32
    return %arg0, %c0_i32, %c0_i32_0 : i32, i32, i32
  }
  func.func @transform_1(%arg0: i32) -> (i32, i32) {
    %c0_i32 = arith.constant 0 : i32
    %c0_i32_0 = arith.constant 0 : i32
    %c0_i32_1 = arith.constant 0 : i32
    return %c0_i32, %c0_i32_0 : i32, i32
  }
  func.func @transform_2(%arg0: i32) -> (i32, i32) {
    %c0_i32 = arith.constant 0 : i32
    %c0_i32_0 = arith.constant 0 : i32
    %c0_i32_1 = arith.constant 0 : i32
    return %c0_i32, %c0_i32_0 : i32, i32
  }
  func.func @transform_3(%arg0: i32) -> (i32, i32) {
    %c0_i32 = arith.constant 0 : i32
    %c0_i32_0 = arith.constant 0 : i32
    %c0_i32_1 = arith.constant 0 : i32
    return %c0_i32, %c0_i32_0 : i32, i32
  }
  func.func @transform_4(%arg0: i32) -> (i32, i32) {
    %c0_i32 = arith.constant 0 : i32
    %c0_i32_0 = arith.constant 0 : i32
    %c0_i32_1 = arith.constant 0 : i32
    return %c0_i32, %c0_i32_0 : i32, i32
  }
  func.func @transform_5(%arg0: i32) -> (i32, i32) {
    %c0_i32 = arith.constant 0 : i32
    %c0_i32_0 = arith.constant 0 : i32
    %c0_i32_1 = arith.constant 0 : i32
    return %c0_i32, %c0_i32_0 : i32, i32
  }
  func.func @transform_6(%arg0: i32) -> (i32, i32) {
    %c0_i32 = arith.constant 0 : i32
    %c0_i32_0 = arith.constant 0 : i32
    %c0_i32_1 = arith.constant 0 : i32
    return %c0_i32, %c0_i32_0 : i32, i32
  }
  func.func @transform_7(%arg0: i32) -> (i32, i32) {
    %c0_i32 = arith.constant 0 : i32
    %c0_i32_0 = arith.constant 0 : i32
    %c0_i32_1 = arith.constant 0 : i32
    return %c0_i32, %c0_i32_0 : i32, i32
  }
  func.func @transform_8(%arg0: i32) -> (i32, i32) {
    %c0_i32 = arith.constant 0 : i32
    %c0_i32_0 = arith.constant 0 : i32
    %c0_i32_1 = arith.constant 0 : i32
    return %c0_i32, %c0_i32_0 : i32, i32
  }
  func.func @transform_9(%arg0: i32) -> (i32, i32) {
    %c0_i32 = arith.constant 0 : i32
    %c0_i32_0 = arith.constant 0 : i32
    %c0_i32_1 = arith.constant 0 : i32
    return %c0_i32, %c0_i32_0 : i32, i32
  }
  func.func @transform_10(%arg0: i32) -> (i32, i32, i32) {
    %c0_i32 = arith.constant 0 : i32
    %c0_i32_0 = arith.constant 0 : i32
    %c0_i32_1 = arith.constant 0 : i32
    return %arg0, %c0_i32, %c0_i32_0 : i32, i32, i32
  }
  func.func @transform_11(%arg0: i32) -> (i32, i32) {
    %c0_i32 = arith.constant 0 : i32
    %c0_i32_0 = arith.constant 0 : i32
    %c0_i32_1 = arith.constant 0 : i32
    return %c0_i32, %c0_i32_0 : i32, i32
  }
  func.func @transform_12(%arg0: i32) -> (i32, i32) {
    %c0_i32 = arith.constant 0 : i32
    %c0_i32_0 = arith.constant 0 : i32
    %c0_i32_1 = arith.constant 0 : i32
    return %c0_i32, %c0_i32_0 : i32, i32
  }
  func.func @transform_13(%arg0: i32) -> (i32, i32) {
    %c0_i32 = arith.constant 0 : i32
    %c0_i32_0 = arith.constant 0 : i32
    %c0_i32_1 = arith.constant 0 : i32
    return %c0_i32, %c0_i32_0 : i32, i32
  }
  func.func @transform_14(%arg0: i32) -> (i32, i32) {
    %c0_i32 = arith.constant 0 : i32
    %c0_i32_0 = arith.constant 0 : i32
    %c0_i32_1 = arith.constant 0 : i32
    return %c0_i32, %c0_i32_0 : i32, i32
  }
  func.func @transform_15(%arg0: i32) -> (i32, i32) {
    %c0_i32 = arith.constant 0 : i32
    %c0_i32_0 = arith.constant 0 : i32
    %c0_i32_1 = arith.constant 0 : i32
    return %c0_i32, %c0_i32_0 : i32, i32
  }
  func.func @transform_16(%arg0: i32) -> (i32, i32) {
    %c0_i32 = arith.constant 0 : i32
    %c0_i32_0 = arith.constant 0 : i32
    %c0_i32_1 = arith.constant 0 : i32
    return %c0_i32, %c0_i32_0 : i32, i32
  }
  func.func @transform_17(%arg0: i32) -> (i32, i32, i32) {
    %c0_i32 = arith.constant 0 : i32
    %c0_i32_0 = arith.constant 0 : i32
    %c0_i32_1 = arith.constant 0 : i32
    return %arg0, %c0_i32, %c0_i32_0 : i32, i32, i32
  }
}

</mosaic_0001>

<llo_original>
// kernel: tpu_custom_call.1
$region0: #{tpu_custom_call.1}
  #allocation0 [shape = 'u32[]', space=smem, size = 0x4, offset = 0x4, fixed_abs, tag = 'smem constant byte address 0x4 - core index']
  #allocation1 [shape = 'u32[144,128]{1,0:T(1,128)}', space=vmem, size = 0x12000, scoped, tag = 'internal scratch']
  %s0 = inlined_call_operand.vmem [shape: f32[2,16,8], index: 0, kind: input, shape index: {}]
  %s1 = inlined_call_operand.hbm [shape: f32[8,64], index: 1, kind: input, shape index: {}]
  %s2 = inlined_call_operand.hbm [shape: bf16[8,128], index: 2, kind: input, shape index: {}]
  %s3 = inlined_call_operand.hbm [shape: f32[1,128], index: 3, kind: input, shape index: {}]
  %s4 = inlined_call_operand.hbm [shape: bf16[64,64], index: 4, kind: input, shape index: {}]
  %s5 = inlined_call_operand.hbm [shape: f32[1,64], index: 5, kind: input, shape index: {}]
  %s6 = inlined_call_operand.vmem [shape: bf16[64,192], index: 6, kind: input, shape index: {}]
  %s7 = inlined_call_operand.hbm [shape: f32[1,192], index: 7, kind: input, shape index: {}]
  %s8 = inlined_call_operand.vmem [shape: bf16[64,64], index: 8, kind: input, shape index: {}]
  %s9 = inlined_call_operand.hbm [shape: f32[1,64], index: 9, kind: input, shape index: {}]
  %s10 = inlined_call_operand.hbm [shape: f32[2,8,16], index: 10, kind: input, shape index: {}]
  %s11 = inlined_call_operand.hbm [shape: bf16[16,64], index: 11, kind: input, shape index: {}]
  %s12 = inlined_call_operand.vmem [shape: f32[1,64], index: 12, kind: input, shape index: {}]
  %s13 = inlined_call_operand.hbm [shape: bf16[64,128], index: 13, kind: input, shape index: {}]
  %s14 = inlined_call_operand.vmem [shape: f32[1,128], index: 14, kind: input, shape index: {}]
  %s15 = inlined_call_operand.vmem [shape: bf16[64,4], index: 15, kind: input, shape index: {}]
  %s16 = inlined_call_operand.vmem [shape: f32[1,4], index: 16, kind: input, shape index: {}]
  %s17 = inlined_call_operand.vmem [shape: f32[2,8,4], index: 17, kind: output, shape index: {}]
  %s18 = sld [smem:[#allocation0]]
  $region141: #{tpu_custom_call.1} parent=0
    _
  %s20 = ssub.s32 1, %s18
  %s21 = scalar_select 0, %s20, %s18
  $region1: #{tpu_custom_call.1} parent=0
    #allocation2 [shape = 'u8[4096]{0}', space=vmem, size = 0x1000, scoped, tag = 'input window, operand 1, single buffered']
    #allocation3 [shape = 's32[2]{0}', space=sflag, size = 0x8, scoped, tag = 'scoped memory for tpu_custom_call.1']
    #allocation4 [shape = 'u8[2048]{0}', space=vmem, size = 0x800, scoped, tag = 'input window, operand 2, single buffered']
    #allocation5 [shape = 's32[1]{0}', space=sflag, size = 0x4, scoped, tag = 'scoped memory for tpu_custom_call.1']
    #allocation6 [shape = 'u8[512]{0}', space=vmem, size = 0x400, scoped, tag = 'input window, operand 3, single buffered']
    #allocation7 [shape = 'u8[16384]{0}', space=vmem, size = 0x4000, scoped, tag = 'input window, operand 4, single buffered']
    #allocation8 [shape = 's32[1]{0}', space=sflag, size = 0x4, scoped, tag = 'scoped memory for tpu_custom_call.1']
    #allocation9 [shape = 'u8[512]{0}', space=vmem, size = 0x400, scoped, tag = 'input window, operand 5, single buffered']
    #allocation10 [shape = 'u8[1024]{0}', space=vmem, size = 0x400, scoped, tag = 'input window, operand 7, single buffered']
    #allocation11 [shape = 's32[1]{0}', space=sflag, size = 0x4, scoped, tag = 'scoped memory for tpu_custom_call.1']
    #allocation12 [shape = 'u8[512]{0}', space=vmem, size = 0x400, scoped, tag = 'input window, operand 9, single buffered']
    #allocation13 [shape = 'u8[8192]{0}', space=vmem, size = 0x2000, scoped, tag = 'input window, operand 10']
    #allocation14 [shape = 's32[2]{0}', space=sflag, size = 0x8, scoped, tag = 'scoped memory for tpu_custom_call.1']
    #allocation15 [shape = 'u8[4096]{0}', space=vmem, size = 0x1000, scoped, tag = 'input window, operand 11, single buffered']
    #allocation16 [shape = 'u8[16384]{0}', space=vmem, size = 0x4000, scoped, tag = 'input window, operand 13, single buffered']
    #allocation17 [shape = 's32[1]{0}', space=sflag, size = 0x4, scoped, tag = 'scoped memory for tpu_custom_call.1']
    %22 = vsyncpa [#allocation3], 0
    %23 = vsyncpa [#allocation5], 0
    %24 = vsyncpa [#allocation8], 0
    %25 = vsyncpa [#allocation11], 0
    %26 = vsyncpa [#allocation14], 0
    %s27 = scalar_lea.sflag [#allocation14], 1
    %28 = vsyncpa %s27, 0
    %29 = vsyncpa [#allocation17], 0
    loop: start=0, step=1, limit=4
    $region2: #{tpu_custom_call.1} parent=1 // loop_pre_header
      _
    $region3: #{tpu_custom_call.1} parent=1 // loop_header
      %s31 = sphi 0, %s35
      %p32 = scmp.ge.s32.totalorder %s31, 4
      %s41 = sphi 0, %s43
      %s44 = sphi 0, %s41
      %s45 = sphi 0, %s44
      %s61 = sphi 0, %s45
      %s65 = sphi 0, %s65
      %s67 = sphi 0, %s65
      %s68 = sphi 0, %s67
      %s82 = sphi 0, %s68
      %s86 = sphi 0, %s86
      %s88 = sphi 0, %s86
      %s89 = sphi 0, %s88
      %s103 = sphi 0, %s89
      %s107 = sphi 0, %s107
      %s109 = sphi 0, %s107
      %s110 = sphi 0, %s109
      %s124 = sphi 0, %s110
      %s128 = sphi 0, %s128
      %s130 = sphi 0, %s128
      %s131 = sphi 0, %s130
      %s145 = sphi 0, %s131
      %s149 = sphi 0, %s149
      %s151 = sphi 0, %s149
      %s152 = sphi 0, %s151
      %s166 = sphi 0, %s152
      %s170 = sphi 0, %s170
      %s172 = sphi 0, %s170
      %s173 = sphi 0, %s172
      %s187 = sphi 0, %s173
      %s191 = sphi 0, %s191
      %s193 = sphi 0, %s191
      %s194 = sphi 0, %s193
      %s208 = sphi 0, %s194
      %s212 = sphi 0, %s212
      %s214 = sphi 0, %s212
      %s215 = sphi 0, %s214
      %s229 = sphi 0, %s215
      %s233 = sphi 0, %s233
      %s235 = sphi 0, %s233
      %s236 = sphi 0, %s235
      %s250 = sphi 0, %s236
      %s256 = sphi 0, %s258
      %s259 = sphi 0, %s256
      %s260 = sphi 0, %s259
      %s276 = sphi 0, %s260
      %s280 = sphi 0, %s280
      %s282 = sphi 0, %s280
      %s283 = sphi 0, %s282
      %s297 = sphi 0, %s283
      %s301 = sphi 0, %s301
      %s303 = sphi 0, %s301
      %s304 = sphi 0, %s303
      %s318 = sphi 0, %s304
      %s322 = sphi 0, %s322
      %s324 = sphi 0, %s322
      %s325 = sphi 0, %s324
      %s339 = sphi 0, %s325
      %s343 = sphi 0, %s343
      %s345 = sphi 0, %s343
      %s346 = sphi 0, %s345
      %s360 = sphi 0, %s346
      %s364 = sphi 0, %s364
      %s366 = sphi 0, %s364
      %s367 = sphi 0, %s366
      %s381 = sphi 0, %s367
      %s385 = sphi 0, %s385
      %s387 = sphi 0, %s385
      %s388 = sphi 0, %s387
      %s402 = sphi 0, %s388
      %s408 = sphi 0, %s410
      %s411 = sphi 0, %s408
      %s412 = sphi 0, %s411
      %s428 = sphi 0, %s412
    $region4: #{tpu_custom_call.1} parent=1 // loop_header_branch
      %34 = sbr.rel (%p32) target = $region8
    $region5: #{tpu_custom_call.1} parent=1 // loop_body
      %s36 = ssub.s32 %s31, 1
      %s37 = ssub.s32 %s31, 2
      %s38 = sadd.s32 %s31, 1
      %s39 = ssub.s32 %s31, %s38
      %p40 = scmp.eq.s32.totalorder %s39, 0
      %s42 = sadd.s32 %s41, 1
      %s43 = scalar_select %p40, %s41, %s42
      %p46 = pneg %p40
      %p47 = scmp.eq.s32.totalorder %s31, 1
      %p48 = por %p46, %p47
      %p49 = scmp.ne.s32.totalorder %s41, %s44
      %p50 = scmp.eq.s32.totalorder %s31, 0
      %p51 = por %p49, %p50
      %p52 = scmp.ne.s32.totalorder %s41, %s44
      %p53 = scmp.eq.s32.totalorder %s36, 1
      %p54 = por %p52, %p53
      %p55 = scmp.ne.s32.totalorder %s44, %s45
      %p56 = scmp.eq.s32.totalorder %s36, 0
      %p57 = por %p55, %p56
      %p58 = scmp.ne.s32.totalorder %s44, %s45
      %p59 = scmp.eq.s32.totalorder %s37, 1
      %p60 = por %p58, %p59
      %p62 = scmp.ne.s32.totalorder %s45, %s61
      %p63 = scmp.eq.s32.totalorder %s37, 0
      %p64 = por %p62, %p63
      %s66 = sadd.s32 %s65, 1
      %p69 = scmp.eq.s32.totalorder %s31, 1
      %p70 = scmp.ne.s32.totalorder %s65, %s67
      %p71 = scmp.eq.s32.totalorder %s31, 0
      %p72 = por %p70, %p71
      %p73 = scmp.ne.s32.totalorder %s65, %s67
      %p74 = scmp.eq.s32.totalorder %s36, 1
      %p75 = por %p73, %p74
      %p76 = scmp.ne.s32.totalorder %s67, %s68
      %p77 = scmp.eq.s32.totalorder %s36, 0
      %p78 = por %p76, %p77
      %p79 = scmp.ne.s32.totalorder %s67, %s68
      %p80 = scmp.eq.s32.totalorder %s37, 1
      %p81 = por %p79, %p80
      %p83 = scmp.ne.s32.totalorder %s68, %s82
      %p84 = scmp.eq.s32.totalorder %s37, 0
      %p85 = por %p83, %p84
      %s87 = sadd.s32 %s86, 1
      %p90 = scmp.eq.s32.totalorder %s31, 1
      %p91 = scmp.ne.s32.totalorder %s86, %s88
      %p92 = scmp.eq.s32.totalorder %s31, 0
      %p93 = por %p91, %p92
      %p94 = scmp.ne.s32.totalorder %s86, %s88
      %p95 = scmp.eq.s32.totalorder %s36, 1
      %p96 = por %p94, %p95
      %p97 = scmp.ne.s32.totalorder %s88, %s89
      %p98 = scmp.eq.s32.totalorder %s36, 0
      %p99 = por %p97, %p98
      %p100 = scmp.ne.s32.totalorder %s88, %s89
      %p101 = scmp.eq.s32.totalorder %s37, 1
      %p102 = por %p100, %p101
      %p104 = scmp.ne.s32.totalorder %s89, %s103
      %p105 = scmp.eq.s32.totalorder %s37, 0
      %p106 = por %p104, %p105
      %s108 = sadd.s32 %s107, 1
      %p111 = scmp.eq.s32.totalorder %s31, 1
      %p112 = scmp.ne.s32.totalorder %s107, %s109
      %p113 = scmp.eq.s32.totalorder %s31, 0
      %p114 = por %p112, %p113
      %p115 = scmp.ne.s32.totalorder %s107, %s109
      %p116 = scmp.eq.s32.totalorder %s36, 1
      %p117 = por %p115, %p116
      %p118 = scmp.ne.s32.totalorder %s109, %s110
      %p119 = scmp.eq.s32.totalorder %s36, 0
      %p120 = por %p118, %p119
      %p121 = scmp.ne.s32.totalorder %s109, %s110
      %p122 = scmp.eq.s32.totalorder %s37, 1
      %p123 = por %p121, %p122
      %p125 = scmp.ne.s32.totalorder %s110, %s124
      %p126 = scmp.eq.s32.totalorder %s37, 0
      %p127 = por %p125, %p126
      %s129 = sadd.s32 %s128, 1
      %p132 = scmp.eq.s32.totalorder %s31, 1
      %p133 = scmp.ne.s32.totalorder %s128, %s130
      %p134 = scmp.eq.s32.totalorder %s31, 0
      %p135 = por %p133, %p134
      %p136 = scmp.ne.s32.totalorder %s128, %s130
      %p137 = scmp.eq.s32.totalorder %s36, 1
      %p138 = por %p136, %p137
      %p139 = scmp.ne.s32.totalorder %s130, %s131
      %p140 = scmp.eq.s32.totalorder %s36, 0
      %p141 = por %p139, %p140
      %p142 = scmp.ne.s32.totalorder %s130, %s131
      %p143 = scmp.eq.s32.totalorder %s37, 1
      %p144 = por %p142, %p143
      %p146 = scmp.ne.s32.totalorder %s131, %s145
      %p147 = scmp.eq.s32.totalorder %s37, 0
      %p148 = por %p146, %p147
      %s150 = sadd.s32 %s149, 1
      %p153 = scmp.eq.s32.totalorder %s31, 1
      %p154 = scmp.ne.s32.totalorder %s149, %s151
      %p155 = scmp.eq.s32.totalorder %s31, 0
      %p156 = por %p154, %p155
      %p157 = scmp.ne.s32.totalorder %s149, %s151
      %p158 = scmp.eq.s32.totalorder %s36, 1
      %p159 = por %p157, %p158
      %p160 = scmp.ne.s32.totalorder %s151, %s152
      %p161 = scmp.eq.s32.totalorder %s36, 0
      %p162 = por %p160, %p161
      %p163 = scmp.ne.s32.totalorder %s151, %s152
      %p164 = scmp.eq.s32.totalorder %s37, 1
      %p165 = por %p163, %p164
      %p167 = scmp.ne.s32.totalorder %s152, %s166
      %p168 = scmp.eq.s32.totalorder %s37, 0
      %p169 = por %p167, %p168
      %s171 = sadd.s32 %s170, 1
      %p174 = scmp.eq.s32.totalorder %s31, 1
      %p175 = scmp.ne.s32.totalorder %s170, %s172
      %p176 = scmp.eq.s32.totalorder %s31, 0
      %p177 = por %p175, %p176
      %p178 = scmp.ne.s32.totalorder %s170, %s172
      %p179 = scmp.eq.s32.totalorder %s36, 1
      %p180 = por %p178, %p179
      %p181 = scmp.ne.s32.totalorder %s172, %s173
      %p182 = scmp.eq.s32.totalorder %s36, 0
      %p183 = por %p181, %p182
      %p184 = scmp.ne.s32.totalorder %s172, %s173
      %p185 = scmp.eq.s32.totalorder %s37, 1
      %p186 = por %p184, %p185
      %p188 = scmp.ne.s32.totalorder %s173, %s187
      %p189 = scmp.eq.s32.totalorder %s37, 0
      %p190 = por %p188, %p189
      %s192 = sadd.s32 %s191, 1
      %p195 = scmp.eq.s32.totalorder %s31, 1
      %p196 = scmp.ne.s32.totalorder %s191, %s193
      %p197 = scmp.eq.s32.totalorder %s31, 0
      %p198 = por %p196, %p197
      %p199 = scmp.ne.s32.totalorder %s191, %s193
      %p200 = scmp.eq.s32.totalorder %s36, 1
      %p201 = por %p199, %p200
      %p202 = scmp.ne.s32.totalorder %s193, %s194
      %p203 = scmp.eq.s32.totalorder %s36, 0
      %p204 = por %p202, %p203
      %p205 = scmp.ne.s32.totalorder %s193, %s194
      %p206 = scmp.eq.s32.totalorder %s37, 1
      %p207 = por %p205, %p206
      %p209 = scmp.ne.s32.totalorder %s194, %s208
      %p210 = scmp.eq.s32.totalorder %s37, 0
      %p211 = por %p209, %p210
      %s213 = sadd.s32 %s212, 1
      %p216 = scmp.eq.s32.totalorder %s31, 1
      %p217 = scmp.ne.s32.totalorder %s212, %s214
      %p218 = scmp.eq.s32.totalorder %s31, 0
      %p219 = por %p217, %p218
      %p220 = scmp.ne.s32.totalorder %s212, %s214
      %p221 = scmp.eq.s32.totalorder %s36, 1
      %p222 = por %p220, %p221
      %p223 = scmp.ne.s32.totalorder %s214, %s215
      %p224 = scmp.eq.s32.totalorder %s36, 0
      %p225 = por %p223, %p224
      %p226 = scmp.ne.s32.totalorder %s214, %s215
      %p227 = scmp.eq.s32.totalorder %s37, 1
      %p228 = por %p226, %p227
      %p230 = scmp.ne.s32.totalorder %s215, %s229
      %p231 = scmp.eq.s32.totalorder %s37, 0
      %p232 = por %p230, %p231
      %s234 = sadd.s32 %s233, 1
      %p237 = scmp.eq.s32.totalorder %s31, 1
      %p238 = scmp.ne.s32.totalorder %s233, %s235
      %p239 = scmp.eq.s32.totalorder %s31, 0
      %p240 = por %p238, %p239
      %p241 = scmp.ne.s32.totalorder %s233, %s235
      %p242 = scmp.eq.s32.totalorder %s36, 1
      %p243 = por %p241, %p242
      %p244 = scmp.ne.s32.totalorder %s235, %s236
      %p245 = scmp.eq.s32.totalorder %s36, 0
      %p246 = por %p244, %p245
      %p247 = scmp.ne.s32.totalorder %s235, %s236
      %p248 = scmp.eq.s32.totalorder %s37, 1
      %p249 = por %p247, %p248
      %p251 = scmp.ne.s32.totalorder %s236, %s250
      %p252 = scmp.eq.s32.totalorder %s37, 0
      %p253 = por %p251, %p252
      %s254 = ssub.s32 %s31, %s38
      %p255 = scmp.eq.s32.totalorder %s254, 0
      %s257 = sadd.s32 %s256, 1
      %s258 = scalar_select %p255, %s256, %s257
      %p261 = pneg %p255
      %p262 = scmp.eq.s32.totalorder %s31, 1
      %p263 = por %p261, %p262
      %p264 = scmp.ne.s32.totalorder %s256, %s259
      %p265 = scmp.eq.s32.totalorder %s31, 0
      %p266 = por %p264, %p265
      %p267 = scmp.ne.s32.totalorder %s256, %s259
      %p268 = scmp.eq.s32.totalorder %s36, 1
      %p269 = por %p267, %p268
      %p270 = scmp.ne.s32.totalorder %s259, %s260
      %p271 = scmp.eq.s32.totalorder %s36, 0
      %p272 = por %p270, %p271
      %p273 = scmp.ne.s32.totalorder %s259, %s260
      %p274 = scmp.eq.s32.totalorder %s37, 1
      %p275 = por %p273, %p274
      %p277 = scmp.ne.s32.totalorder %s260, %s276
      %p278 = scmp.eq.s32.totalorder %s37, 0
      %p279 = por %p277, %p278
      %s281 = sadd.s32 %s280, 1
      %p284 = scmp.eq.s32.totalorder %s31, 1
      %p285 = scmp.ne.s32.totalorder %s280, %s282
      %p286 = scmp.eq.s32.totalorder %s31, 0
      %p287 = por %p285, %p286
      %p288 = scmp.ne.s32.totalorder %s280, %s282
      %p289 = scmp.eq.s32.totalorder %s36, 1
      %p290 = por %p288, %p289
      %p291 = scmp.ne.s32.totalorder %s282, %s283
      %p292 = scmp.eq.s32.totalorder %s36, 0
      %p293 = por %p291, %p292
      %p294 = scmp.ne.s32.totalorder %s282, %s283
      %p295 = scmp.eq.s32.totalorder %s37, 1
      %p296 = por %p294, %p295
      %p298 = scmp.ne.s32.totalorder %s283, %s297
      %p299 = scmp.eq.s32.totalorder %s37, 0
      %p300 = por %p298, %p299
      %s302 = sadd.s32 %s301, 1
      %p305 = scmp.eq.s32.totalorder %s31, 1
      %p306 = scmp.ne.s32.totalorder %s301, %s303
      %p307 = scmp.eq.s32.totalorder %s31, 0
      %p308 = por %p306, %p307
      %p309 = scmp.ne.s32.totalorder %s301, %s303
      %p310 = scmp.eq.s32.totalorder %s36, 1
      %p311 = por %p309, %p310
      %p312 = scmp.ne.s32.totalorder %s303, %s304
      %p313 = scmp.eq.s32.totalorder %s36, 0
      %p314 = por %p312, %p313
      %p315 = scmp.ne.s32.totalorder %s303, %s304
      %p316 = scmp.eq.s32.totalorder %s37, 1
      %p317 = por %p315, %p316
      %p319 = scmp.ne.s32.totalorder %s304, %s318
      %p320 = scmp.eq.s32.totalorder %s37, 0
      %p321 = por %p319, %p320
      %s323 = sadd.s32 %s322, 1
      %p326 = scmp.eq.s32.totalorder %s31, 1
      %p327 = scmp.ne.s32.totalorder %s322, %s324
      %p328 = scmp.eq.s32.totalorder %s31, 0
      %p329 = por %p327, %p328
      %p330 = scmp.ne.s32.totalorder %s322, %s324
      %p331 = scmp.eq.s32.totalorder %s36, 1
      %p332 = por %p330, %p331
      %p333 = scmp.ne.s32.totalorder %s324, %s325
      %p334 = scmp.eq.s32.totalorder %s36, 0
      %p335 = por %p333, %p334
      %p336 = scmp.ne.s32.totalorder %s324, %s325
      %p337 = scmp.eq.s32.totalorder %s37, 1
      %p338 = por %p336, %p337
      %p340 = scmp.ne.s32.totalorder %s325, %s339
      %p341 = scmp.eq.s32.totalorder %s37, 0
      %p342 = por %p340, %p341
      %s344 = sadd.s32 %s343, 1
      %p347 = scmp.eq.s32.totalorder %s31, 1
      %p348 = scmp.ne.s32.totalorder %s343, %s345
      %p349 = scmp.eq.s32.totalorder %s31, 0
      %p350 = por %p348, %p349
      %p351 = scmp.ne.s32.totalorder %s343, %s345
      %p352 = scmp.eq.s32.totalorder %s36, 1
      %p353 = por %p351, %p352
      %p354 = scmp.ne.s32.totalorder %s345, %s346
      %p355 = scmp.eq.s32.totalorder %s36, 0
      %p356 = por %p354, %p355
      %p357 = scmp.ne.s32.totalorder %s345, %s346
      %p358 = scmp.eq.s32.totalorder %s37, 1
      %p359 = por %p357, %p358
      %p361 = scmp.ne.s32.totalorder %s346, %s360
      %p362 = scmp.eq.s32.totalorder %s37, 0
      %p363 = por %p361, %p362
      %s365 = sadd.s32 %s364, 1
      %p368 = scmp.eq.s32.totalorder %s31, 1
      %p369 = scmp.ne.s32.totalorder %s364, %s366
      %p370 = scmp.eq.s32.totalorder %s31, 0
      %p371 = por %p369, %p370
      %p372 = scmp.ne.s32.totalorder %s364, %s366
      %p373 = scmp.eq.s32.totalorder %s36, 1
      %p374 = por %p372, %p373
      %p375 = scmp.ne.s32.totalorder %s366, %s367
      %p376 = scmp.eq.s32.totalorder %s36, 0
      %p377 = por %p375, %p376
      %p378 = scmp.ne.s32.totalorder %s366, %s367
      %p379 = scmp.eq.s32.totalorder %s37, 1
      %p380 = por %p378, %p379
      %p382 = scmp.ne.s32.totalorder %s367, %s381
      %p383 = scmp.eq.s32.totalorder %s37, 0
      %p384 = por %p382, %p383
      %s386 = sadd.s32 %s385, 1
      %p389 = scmp.eq.s32.totalorder %s31, 1
      %p390 = scmp.ne.s32.totalorder %s385, %s387
      %p391 = scmp.eq.s32.totalorder %s31, 0
      %p392 = por %p390, %p391
      %p393 = scmp.ne.s32.totalorder %s385, %s387
      %p394 = scmp.eq.s32.totalorder %s36, 1
      %p395 = por %p393, %p394
      %p396 = scmp.ne.s32.totalorder %s387, %s388
      %p397 = scmp.eq.s32.totalorder %s36, 0
      %p398 = por %p396, %p397
      %p399 = scmp.ne.s32.totalorder %s387, %s388
      %p400 = scmp.eq.s32.totalorder %s37, 1
      %p401 = por %p399, %p400
      %p403 = scmp.ne.s32.totalorder %s388, %s402
      %p404 = scmp.eq.s32.totalorder %s37, 0
      %p405 = por %p403, %p404
      %s406 = ssub.s32 %s31, %s38
      %p407 = scmp.eq.s32.totalorder %s406, 0
      %s409 = sadd.s32 %s408, 1
      %s410 = scalar_select %p407, %s408, %s409
      %p413 = pneg %p407
      %p414 = scmp.eq.s32.totalorder %s31, 1
      %p415 = por %p413, %p414
      %p416 = scmp.ne.s32.totalorder %s408, %s411
      %p417 = scmp.eq.s32.totalorder %s31, 0
      %p418 = por %p416, %p417
      %p419 = scmp.ne.s32.totalorder %s408, %s411
      %p420 = scmp.eq.s32.totalorder %s36, 1
      %p421 = por %p419, %p420
      %p422 = scmp.ne.s32.totalorder %s411, %s412
      %p423 = scmp.eq.s32.totalorder %s36, 0
      %p424 = por %p422, %p423
      %p425 = scmp.ne.s32.totalorder %s411, %s412
      %p426 = scmp.eq.s32.totalorder %s37, 1
      %p427 = por %p425, %p426
      %p429 = scmp.ne.s32.totalorder %s412, %s428
      %p430 = scmp.eq.s32.totalorder %s37, 0
      %p431 = por %p429, %p430
      %p432 = scmp.le.s32.totalorder 1, %s31
      %p433 = scmp.lt.s32.totalorder %s31, 3
      %p434 = pnand %p432, %p433
      %p435 = pneg %p434
      // Predicated region
      $region9: #{tpu_custom_call.1} parent=5 // pred_check
        _
      $region10: #{tpu_custom_call.1} parent=5 // pred_check_branch
        %437 = sbr.rel (%p434) target = $region12
      $region11: #{tpu_custom_call.1} parent=5 // pred_region
        %s438 = ssub.s32 %s31, 1
        // Predicated region
        $region13: #{tpu_custom_call.1} parent=11 // pred_check
          %p439 = pneg %p78
        $region14: #{tpu_custom_call.1} parent=11 // pred_check_branch
          %441 = sbr.rel (%p439) target = $region16
        $region15: #{tpu_custom_call.1} parent=11 // pred_region
          %s443 = ssub.s32 128, 128
          %444 = vsyncadd [#allocation3], %s443
          %s446 = sshll.u32 [#allocation2], 4
          %s447 = int_to_ptr.vmem [resolvable:$true] %s446
          %449 = dma.hbm_to_vmem [thread:$0]  %s1, 128, %s447, [#allocation3]
        $region16: #{tpu_custom_call.1} parent=11 // pred_fallthru
          _
        // Predicated region
        $region17: #{tpu_custom_call.1} parent=11 // pred_check
          %p450 = pneg %p99
        $region18: #{tpu_custom_call.1} parent=11 // pred_check_branch
          %452 = sbr.rel (%p450) target = $region20
        $region19: #{tpu_custom_call.1} parent=11 // pred_region
          %s454 = ssub.s32 64, 64
          %455 = vsyncadd [#allocation5], %s454
          %s457 = sshll.u32 [#allocation4], 4
          %s458 = int_to_ptr.vmem [resolvable:$true] %s457
          %460 = dma.hbm_to_vmem [thread:$0]  %s2, 64, %s458, [#allocation5]
        $region20: #{tpu_custom_call.1} parent=11 // pred_fallthru
          _
        // Predicated region
        $region21: #{tpu_custom_call.1} parent=11 // pred_check
          %p461 = pneg %p120
        $region22: #{tpu_custom_call.1} parent=11 // pred_check_branch
          %463 = sbr.rel (%p461) target = $region24
        $region23: #{tpu_custom_call.1} parent=11 // pred_region
          %s465 = ssub.s32 16, 16
          %466 = vsyncadd [#allocation5], %s465
          %s468 = sshll.u32 [#allocation6], 4
          %s469 = int_to_ptr.vmem [resolvable:$true] %s468
          %471 = dma.hbm_to_vmem [thread:$0]  %s3, 16, %s469, [#allocation5]
        $region24: #{tpu_custom_call.1} parent=11 // pred_fallthru
          _
        // Predicated region
        $region25: #{tpu_custom_call.1} parent=11 // pred_check
          %p472 = pneg %p141
        $region26: #{tpu_custom_call.1} parent=11 // pred_check_branch
          %474 = sbr.rel (%p472) target = $region28
        $region27: #{tpu_custom_call.1} parent=11 // pred_region
          %s476 = ssub.s32 512, 512
          %477 = vsyncadd [#allocation8], %s476
          %s478 = sshll.u32 [#allocation7], 4
          %s479 = int_to_ptr.vmem [resolvable:$true] %s478
          %484 = dma.hbm_to_vmem [thread:$0]  %s4, 512, %s479, [#allocation8], 64, 64, 4
        $region28: #{tpu_custom_call.1} parent=11 // pred_fallthru
          _
        // Predicated region
        $region29: #{tpu_custom_call.1} parent=11 // pred_check
          %p485 = pneg %p162
        $region30: #{tpu_custom_call.1} parent=11 // pred_check_branch
          %487 = sbr.rel (%p485) target = $region32
        $region31: #{tpu_custom_call.1} parent=11 // pred_region
          %s489 = ssub.s32 16, 16
          %490 = vsyncadd [#allocation8], %s489
          %s492 = sshll.u32 [#allocation9], 4
          %s493 = int_to_ptr.vmem [resolvable:$true] %s492
          %495 = dma.hbm_to_vmem [thread:$0]  %s5, 16, %s493, [#allocation8]
        $region32: #{tpu_custom_call.1} parent=11 // pred_fallthru
          _
        // Predicated region
        $region33: #{tpu_custom_call.1} parent=11 // pred_check
          %p496 = pneg %p183
        $region34: #{tpu_custom_call.1} parent=11 // pred_check_branch
          %498 = sbr.rel (%p496) target = $region36
        $region35: #{tpu_custom_call.1} parent=11 // pred_region
          _
        $region36: #{tpu_custom_call.1} parent=11 // pred_fallthru
          _
        // Predicated region
        $region37: #{tpu_custom_call.1} parent=11 // pred_check
          %p499 = pneg %p204
        $region38: #{tpu_custom_call.1} parent=11 // pred_check_branch
          %501 = sbr.rel (%p499) target = $region40
        $region39: #{tpu_custom_call.1} parent=11 // pred_region
          %s503 = ssub.s32 32, 32
          %504 = vsyncadd [#allocation11], %s503
          %s506 = sshll.u32 [#allocation10], 4
          %s507 = int_to_ptr.vmem [resolvable:$true] %s506
          %509 = dma.hbm_to_vmem [thread:$0]  %s7, 32, %s507, [#allocation11]
        $region40: #{tpu_custom_call.1} parent=11 // pred_fallthru
          _
        // Predicated region
        $region41: #{tpu_custom_call.1} parent=11 // pred_check
          %p510 = pneg %p225
        $region42: #{tpu_custom_call.1} parent=11 // pred_check_branch
          %512 = sbr.rel (%p510) target = $region44
        $region43: #{tpu_custom_call.1} parent=11 // pred_region
          _
        $region44: #{tpu_custom_call.1} parent=11 // pred_fallthru
          _
        // Predicated region
        $region45: #{tpu_custom_call.1} parent=11 // pred_check
          %p513 = pneg %p246
        $region46: #{tpu_custom_call.1} parent=11 // pred_check_branch
          %515 = sbr.rel (%p513) target = $region48
        $region47: #{tpu_custom_call.1} parent=11 // pred_region
          %s517 = ssub.s32 16, 16
          %518 = vsyncadd [#allocation11], %s517
          %s520 = sshll.u32 [#allocation12], 4
          %s521 = int_to_ptr.vmem [resolvable:$true] %s520
          %523 = dma.hbm_to_vmem [thread:$0]  %s9, 16, %s521, [#allocation11]
        $region48: #{tpu_custom_call.1} parent=11 // pred_fallthru
          _
        // Predicated region
        $region49: #{tpu_custom_call.1} parent=11 // pred_check
          %p524 = pneg %p293
        $region50: #{tpu_custom_call.1} parent=11 // pred_check_branch
          %526 = sbr.rel (%p524) target = $region52
        $region51: #{tpu_custom_call.1} parent=11 // pred_region
          %s528 = ssub.s32 128, 128
          %529 = vsyncadd [#allocation14], %s528
          %s530 = sshll.u32 [#allocation15], 4
          %s531 = int_to_ptr.vmem [resolvable:$true] %s530
          %536 = dma.hbm_to_vmem [thread:$0]  %s11, 128, %s531, [#allocation14], 64, 64, 4
        $region52: #{tpu_custom_call.1} parent=11 // pred_fallthru
          _
        // Predicated region
        $region53: #{tpu_custom_call.1} parent=11 // pred_check
          %p537 = pneg %p314
        $region54: #{tpu_custom_call.1} parent=11 // pred_check_branch
          %539 = sbr.rel (%p537) target = $region56
        $region55: #{tpu_custom_call.1} parent=11 // pred_region
          _
        $region56: #{tpu_custom_call.1} parent=11 // pred_fallthru
          _
        // Predicated region
        $region57: #{tpu_custom_call.1} parent=11 // pred_check
          %p540 = pneg %p335
        $region58: #{tpu_custom_call.1} parent=11 // pred_check_branch
          %542 = sbr.rel (%p540) target = $region60
        $region59: #{tpu_custom_call.1} parent=11 // pred_region
          %s544 = ssub.s32 512, 512
          %545 = vsyncadd [#allocation17], %s544
          %s546 = sshll.u32 [#allocation16], 4
          %s547 = int_to_ptr.vmem [resolvable:$true] %s546
          %552 = dma.hbm_to_vmem [thread:$0]  %s13, 512, %s547, [#allocation17], 64, 64, 4
        $region60: #{tpu_custom_call.1} parent=11 // pred_fallthru
          _
        // Predicated region
        $region61: #{tpu_custom_call.1} parent=11 // pred_check
          %p553 = pneg %p356
        $region62: #{tpu_custom_call.1} parent=11 // pred_check_branch
          %555 = sbr.rel (%p553) target = $region64
        $region63: #{tpu_custom_call.1} parent=11 // pred_region
          _
        $region64: #{tpu_custom_call.1} parent=11 // pred_fallthru
          _
        // Predicated region
        $region65: #{tpu_custom_call.1} parent=11 // pred_check
          %p556 = pneg %p377
        $region66: #{tpu_custom_call.1} parent=11 // pred_check_branch
          %558 = sbr.rel (%p556) target = $region68
        $region67: #{tpu_custom_call.1} parent=11 // pred_region
          _
        $region68: #{tpu_custom_call.1} parent=11 // pred_fallthru
          _
        // Predicated region
        $region69: #{tpu_custom_call.1} parent=11 // pred_check
          %p559 = pneg %p398
        $region70: #{tpu_custom_call.1} parent=11 // pred_check_branch
          %561 = sbr.rel (%p559) target = $region72
        $region71: #{tpu_custom_call.1} parent=11 // pred_region
          _
        $region72: #{tpu_custom_call.1} parent=11 // pred_fallthru
          _
      $region12: #{tpu_custom_call.1} parent=5 // pred_fallthru
        _
      %p562 = scmp.lt.s32.totalorder %s31, 2
      // Predicated region
      $region73: #{tpu_custom_call.1} parent=5 // pred_check
        %p563 = pneg %p562
      $region74: #{tpu_custom_call.1} parent=5 // pred_check_branch
        %565 = sbr.rel (%p563) target = $region76
      $region75: #{tpu_custom_call.1} parent=5 // pred_region
        // Predicated region
        $region77: #{tpu_custom_call.1} parent=75 // pred_check
          %p566 = pneg %p51
        $region78: #{tpu_custom_call.1} parent=75 // pred_check_branch
          %568 = sbr.rel (%p566) target = $region80
        $region79: #{tpu_custom_call.1} parent=75 // pred_region
          %p569 = scmp.lt.s32.totalorder %s31, 1
          %s570 = scalar_select %p569, %s31, 1
          %s571 = smul.addr %s570, 2
          %s572 = smul.addr %s571, 8
          %s573 = scalar_lea.vmem %s0, %s572
        $region80: #{tpu_custom_call.1} parent=75 // pred_fallthru
          _
        // Predicated region
        $region81: #{tpu_custom_call.1} parent=75 // pred_check
          %p574 = pneg %p266
        $region82: #{tpu_custom_call.1} parent=75 // pred_check_branch
          %576 = sbr.rel (%p574) target = $region84
        $region83: #{tpu_custom_call.1} parent=75 // pred_region
          %s577 = sand.u32 %s31, 1
          %s578 = scalar_lea.sflag [#allocation14], %s577
          %s579 = sand.u32 %s256, 1
          %s580 = smul.addr %s579, 8
          %s581 = scalar_lea.vmem [#allocation13], %s580
          %s583 = ssub.s32 128, 128
          %584 = vsyncadd %s578, %s583
          %s585 = smul.addr %s31, 128
          %s586 = scalar_lea.hbm %s10, %s585
          %s588 = sshll.u32 %s581, 4
          %s589 = int_to_ptr.vmem [resolvable:$true] %s588
          %591 = dma.hbm_to_vmem [thread:$0]  %s586, 128, %s589, %s578
        $region84: #{tpu_custom_call.1} parent=75 // pred_fallthru
          _
      $region76: #{tpu_custom_call.1} parent=5 // pred_fallthru
        _
      %p592 = scmp.le.s32.totalorder 1, %s31
      %p593 = scmp.lt.s32.totalorder %s31, 3
      %p594 = pnand %p592, %p593
      %p595 = pneg %p594
      // Predicated region
      $region85: #{tpu_custom_call.1} parent=5 // pred_check
        _
      $region86: #{tpu_custom_call.1} parent=5 // pred_check_branch
        %597 = sbr.rel (%p594) target = $region88
      $region87: #{tpu_custom_call.1} parent=5 // pred_region
        %s598 = ssub.s32 %s31, 1
        // Predicated region
        $region89: #{tpu_custom_call.1} parent=87 // pred_check
          %p599 = pneg %p78
        $region90: #{tpu_custom_call.1} parent=87 // pred_check_branch
          %601 = sbr.rel (%p599) target = $region92
        $region91: #{tpu_custom_call.1} parent=87 // pred_region
          %602 = dma.done [#allocation3], 128
        $region92: #{tpu_custom_call.1} parent=87 // pred_fallthru
          _
        // Predicated region
        $region93: #{tpu_custom_call.1} parent=87 // pred_check
          %p603 = pneg %p99
        $region94: #{tpu_custom_call.1} parent=87 // pred_check_branch
          %605 = sbr.rel (%p603) target = $region96
        $region95: #{tpu_custom_call.1} parent=87 // pred_region
          %606 = dma.done [#allocation5], 64
        $region96: #{tpu_custom_call.1} parent=87 // pred_fallthru
          _
        // Predicated region
        $region97: #{tpu_custom_call.1} parent=87 // pred_check
          %p607 = pneg %p120
        $region98: #{tpu_custom_call.1} parent=87 // pred_check_branch
          %609 = sbr.rel (%p607) target = $region100
        $region99: #{tpu_custom_call.1} parent=87 // pred_region
          %610 = dma.done [#allocation5], 16
        $region100: #{tpu_custom_call.1} parent=87 // pred_fallthru
          _
        // Predicated region
        $region101: #{tpu_custom_call.1} parent=87 // pred_check
          %p611 = pneg %p141
        $region102: #{tpu_custom_call.1} parent=87 // pred_check_branch
          %613 = sbr.rel (%p611) target = $region104
        $region103: #{tpu_custom_call.1} parent=87 // pred_region
          %614 = dma.done [#allocation8], 512
        $region104: #{tpu_custom_call.1} parent=87 // pred_fallthru
          _
        // Predicated region
        $region105: #{tpu_custom_call.1} parent=87 // pred_check
          %p615 = pneg %p162
        $region106: #{tpu_custom_call.1} parent=87 // pred_check_branch
          %617 = sbr.rel (%p615) target = $region108
        $region107: #{tpu_custom_call.1} parent=87 // pred_region
          %618 = dma.done [#allocation8], 16
        $region108: #{tpu_custom_call.1} parent=87 // pred_fallthru
          _
        // Predicated region
        $region109: #{tpu_custom_call.1} parent=87 // pred_check
          %p619 = pneg %p204
        $region110: #{tpu_custom_call.1} parent=87 // pred_check_branch
          %621 = sbr.rel (%p619) target = $region112
        $region111: #{tpu_custom_call.1} parent=87 // pred_region
          %622 = dma.done [#allocation11], 32
        $region112: #{tpu_custom_call.1} parent=87 // pred_fallthru
          _
        // Predicated region
        $region113: #{tpu_custom_call.1} parent=87 // pred_check
          %p623 = pneg %p246
        $region114: #{tpu_custom_call.1} parent=87 // pred_check_branch
          %625 = sbr.rel (%p623) target = $region116
        $region115: #{tpu_custom_call.1} parent=87 // pred_region
          %626 = dma.done [#allocation11], 16
        $region116: #{tpu_custom_call.1} parent=87 // pred_fallthru
          _
        %s627 = sand.u32 %s36, 1
        %s628 = scalar_lea.sflag [#allocation14], %s627
        %s629 = sand.u32 %s259, 1
        %s630 = smul.addr %s629, 8
        %s631 = scalar_lea.vmem [#allocation13], %s630
        // Predicated region
        $region117: #{tpu_custom_call.1} parent=87 // pred_check
          %p632 = pneg %p272
        $region118: #{tpu_custom_call.1} parent=87 // pred_check_branch
          %634 = sbr.rel (%p632) target = $region120
        $region119: #{tpu_custom_call.1} parent=87 // pred_region
          %635 = dma.done %s628, 128
        $region120: #{tpu_custom_call.1} parent=87 // pred_fallthru
          _
        // Predicated region
        $region121: #{tpu_custom_call.1} parent=87 // pred_check
          %p636 = pneg %p293
        $region122: #{tpu_custom_call.1} parent=87 // pred_check_branch
          %638 = sbr.rel (%p636) target = $region124
        $region123: #{tpu_custom_call.1} parent=87 // pred_region
          %639 = dma.done [#allocation14], 128
        $region124: #{tpu_custom_call.1} parent=87 // pred_fallthru
          _
        // Predicated region
        $region125: #{tpu_custom_call.1} parent=87 // pred_check
          %p640 = pneg %p335
        $region126: #{tpu_custom_call.1} parent=87 // pred_check_branch
          %642 = sbr.rel (%p640) target = $region128
        $region127: #{tpu_custom_call.1} parent=87 // pred_region
          %643 = dma.done [#allocation17], 512
        $region128: #{tpu_custom_call.1} parent=87 // pred_fallthru
          _
        %p644 = scmp.lt.s32.totalorder %s36, 1
        %s645 = scalar_select %p644, %s36, 1
        %s646 = smul.addr %s645, 2
        %s647 = smul.addr %s646, 8
        %s648 = scalar_lea.vmem %s0, %s647
        %p649 = pneg %p57
        %p650 = pneg %p54
        %p651 = pneg %p78
        %p652 = pneg %p75
        %p653 = pneg %p99
        %p654 = pneg %p96
        %p655 = pneg %p120
        %p656 = pneg %p117
        %p657 = pneg %p141
        %p658 = pneg %p138
        %p659 = pneg %p162
        %p660 = pneg %p159
        %p661 = pneg %p183
        %p662 = pneg %p180
        %p663 = pneg %p204
        %p664 = pneg %p201
        %p665 = pneg %p225
        %p666 = pneg %p222
        %p667 = pneg %p246
        %p668 = pneg %p243
        %s669 = sand.u32 %s36, 1
        %s670 = scalar_lea.sflag [#allocation14], %s669
        %s671 = sand.u32 %s259, 1
        %s672 = smul.addr %s671, 8
        %s673 = scalar_lea.vmem [#allocation13], %s672
        %p674 = pneg %p272
        %p675 = pneg %p269
        %p676 = pneg %p293
        %p677 = pneg %p290
        %p678 = pneg %p314
        %p679 = pneg %p311
        %p680 = pneg %p335
        %p681 = pneg %p332
        %p682 = pneg %p356
        %p683 = pneg %p353
        %p684 = pneg %p377
        %p685 = pneg %p374
        %p686 = pneg %p398
        %p687 = pneg %p395
        %p688 = pneg %p424
        %p689 = pneg %p421
        %p690 = scmp.lt.s32.totalorder %s36, 1
        %s691 = scalar_select %p690, %s36, 1
        %s692 = smul.addr %s691, 8
        %s693 = scalar_lea.vmem %s17, %s692
        %p694 = scmp.lt.s32.totalorder %s36, 1
        %s695 = scalar_select %p694, %s36, 1
        %s696 = smul.addr %s695, 2
        %s697 = smul.addr %s696, 8
        %s698 = scalar_lea.vmem %s0, %s697
        %p699 = scmp.lt.s32.totalorder %s36, 1
        %s700 = scalar_select %p699, %s36, 1
        %s701 = smul.addr %s700, 8
        %s702 = scalar_lea.vmem %s17, %s701
        %v704 = vld [vmem:[%s698] sm:$0xff]
        %v705 = vld [vmem:[%s698 + $0x8] sm:$0xff]
        %v706 = vpack.c.bf16 %v705, %v704
        %v707 = vld [vmem:[#allocation4] sm:$0xf]
        %v708 = vld [vmem:[#allocation6] sm:$0x1]
        %v710 = vlaneseq
        %v711 = vshrl.u32 %v710, 7
        %v712 = vsub.s32 0, %v711
        %v713 = vrot.slane %v708, %v712
        %vm715 = vcmask 64512
        %v717 = vsel %vm715, %v706, 0
        %vm719 = vcmask 1043456
        %v721 = vsel %vm719, %v707, 0
        %723 = vmatprep.subr.bf16.mxu0 0
        %724 = vmatpush1.bf16.msra.mxu0 0
        %725 = vmatprep.subr.bf16.mxu0 0
        %726 = vmatpush1.bf16.msra.mxu0 0
        %727 = vmatprep.subr.bf16.mxu0 0
        %728 = vmatpush1.bf16.msra.mxu0 0
        %729 = vmatprep.subr.bf16.mxu0 0
        %730 = vmatpush1.bf16.msra.mxu0 0
        %731 = vmatprep.subr.bf16.mxu0 0
        %732 = vmatpush1.bf16.msra.mxu0 0
        %733 = vmatprep.subr.bf16.mxu0 0
        %734 = vmatpush1.bf16.msra.mxu0 0
        %735 = vmatprep.subr.bf16.mxu0 0
        %736 = vmatpush1.bf16.msra.mxu0 0
        %737 = vmatprep.subr.bf16.mxu0 0
        %738 = vmatpush1.bf16.msra.mxu0 %v721
        %739 = vmatprep.subr.bf16.mxu0 0
        %740 = vmatpush2.bf16.msra.mxu0 0
        %741 = vmatprep.subr.bf16.mxu0 0
        %742 = vmatpush2.bf16.msra.mxu0 0
        %743 = vmatprep.subr.bf16.mxu0 0
        %744 = vmatpush2.bf16.msra.mxu0 0
        %745 = vmatprep.subr.bf16.mxu0 0
        %746 = vmatpush2.bf16.msra.mxu0 0
        %747 = vmatprep.subr.bf16.mxu0 0
        %748 = vmatpush2.bf16.msra.mxu0 0
        %749 = vmatprep.subr.bf16.mxu0 0
        %750 = vmatpush2.bf16.msra.mxu0 0
        %751 = vmatprep.subr.bf16.mxu0 0
        %752 = vmatpush2.bf16.msra.mxu0 0
        %753 = vmatprep.subr.bf16.mxu0 0
        %754 = vmatpush2.bf16.msra.mxu0 0
        %755 = vmatprep.mubr.bf16.mxu0 0
        %756 = vmatmul.mubr.bf16.gmra.mxu0 %v717
        %v757 = vpop.f32.mrf.mxu0
        %v758 = vadd.f32 %v713, %v757
        %v759 = vpop.f32.mrf.mxu0
        %v760 = vpop.f32.mrf.mxu0
        %v761 = vadd.f32 %v713, %v760
        %v762 = vpop.f32.mrf.mxu0
        %763 = vdwg.mxu0
        %v764 = vld [vmem:[#allocation2] sm:$0xff]
        %v765 = vpack.c.bf16 %v764, %v764
        %v766 = vpack.c.bf16 %v761, %v758
        %vm767 = vcmask 523264
        %v769 = vsel %vm767, %v765, 0
        %v772 = vsel %vm767, %v766, 0
        %774 = vmatprep.subr.bf16.mxu0 0
        %775 = vmatpush1.bf16.xpose.msra.mxu0 0
        %776 = vmatprep.subr.bf16.mxu0 0
        %777 = vmatpush1.bf16.xpose.msra.mxu0 0
        %778 = vmatprep.subr.bf16.mxu0 0
        %779 = vmatpush1.bf16.xpose.msra.mxu0 0
        %780 = vmatprep.subr.bf16.mxu0 0
        %781 = vmatpush1.bf16.xpose.msra.mxu0 0
        %782 = vmatprep.subr.bf16.mxu0 0
        %783 = vmatpush1.bf16.xpose.msra.mxu0 0
        %784 = vmatprep.subr.bf16.mxu0 0
        %785 = vmatpush1.bf16.xpose.msra.mxu0 0
        %786 = vmatprep.subr.bf16.mxu0 0
        %787 = vmatpush1.bf16.xpose.msra.mxu0 0
        %788 = vmatprep.subr.bf16.mxu0 0
        %789 = vmatpush1.bf16.xpose.msra.mxu0 %v772
        %790 = vmatprep.subr.bf16.mxu0 0
        %791 = vmatpush2.bf16.xpose.msra.mxu0 0
        %792 = vmatprep.subr.bf16.mxu0 0
        %793 = vmatpush2.bf16.xpose.msra.mxu0 0
        %794 = vmatprep.subr.bf16.mxu0 0
        %795 = vmatpush2.bf16.xpose.msra.mxu0 0
        %796 = vmatprep.subr.bf16.mxu0 0
        %797 = vmatpush2.bf16.xpose.msra.mxu0 0
        %798 = vmatprep.subr.bf16.mxu0 0
        %799 = vmatpush2.bf16.xpose.msra.mxu0 0
        %800 = vmatprep.subr.bf16.mxu0 0
        %801 = vmatpush2.bf16.xpose.msra.mxu0 0
        %802 = vmatprep.subr.bf16.mxu0 0
        %803 = vmatpush2.bf16.xpose.msra.mxu0 0
        %804 = vmatprep.subr.bf16.mxu0 0
        %805 = vmatpush2.bf16.xpose.msra.mxu0 0
        %806 = vmatprep.mubr.bf16.mxu0 0
        %807 = vmatmul.mubr.bf16.gmra.mxu0 %v769
        %v808 = vpop.f32.mrf.mxu0
        %v809 = vadd.f32 0.0, %v808
        %v810 = vpop.f32.mrf.mxu0
        %v811 = vpop.f32.mrf.mxu0
        %v812 = vpop.f32.mrf.mxu0
        %813 = vdwg.mxu0
        %vm814 = vcmask 130048
        %v815 = vsel %vm814, %v809, -inf
        %816 = vmax.xlane.f32.xlu0 %v815
        %v817 = vpop.xlane.xlu0 %816
        %v818 = vsub.f32 %v809, %v817
        %v819 = vmul.f32 %v818, 1.442695
        %v820 = vpow.pop %v819
        %v821 = vsel %vm814, %v820, 0.0
        %822 = vadd.xlane.f32.xlu0 %v821
        %v823 = vpop.xlane.xlu0 %822
        %v824 = vpack.c.bf16 %v820, %v820
        %826 = vrot.lane.b32.xlu0 %v766, 64
        %v827 = vpop.permute.xlu0 %826
        %v830 = vsel %vm814, %v824, 0
        %832 = vmatprep.subr.bf16.mxu0 0
        %833 = vmatpush1.bf16.msra.mxu0 0
        %834 = vmatprep.subr.bf16.mxu0 0
        %835 = vmatpush1.bf16.msra.mxu0 0
        %836 = vmatprep.subr.bf16.mxu0 0
        %837 = vmatpush1.bf16.msra.mxu0 0
        %838 = vmatprep.subr.bf16.mxu0 0
        %839 = vmatpush1.bf16.msra.mxu0 0
        %840 = vmatprep.subr.bf16.mxu0 0
        %841 = vmatpush1.bf16.msra.mxu0 0
        %842 = vmatprep.subr.bf16.mxu0 0
        %843 = vmatpush1.bf16.msra.mxu0 0
        %844 = vmatprep.subr.bf16.mxu0 0
        %845 = vmatpush1.bf16.msra.mxu0 0
        %846 = vmatprep.subr.bf16.mxu0 0
        %847 = vmatpush1.bf16.msra.mxu0 %v827
        %848 = vmatprep.subr.bf16.mxu0 0
        %849 = vmatpush2.bf16.msra.mxu0 0
        %850 = vmatprep.subr.bf16.mxu0 0
        %851 = vmatpush2.bf16.msra.mxu0 0
        %852 = vmatprep.subr.bf16.mxu0 0
        %853 = vmatpush2.bf16.msra.mxu0 0
        %854 = vmatprep.subr.bf16.mxu0 0
        %855 = vmatpush2.bf16.msra.mxu0 0
        %856 = vmatprep.subr.bf16.mxu0 0
        %857 = vmatpush2.bf16.msra.mxu0 0
        %858 = vmatprep.subr.bf16.mxu0 0
        %859 = vmatpush2.bf16.msra.mxu0 0
        %860 = vmatprep.subr.bf16.mxu0 0
        %861 = vmatpush2.bf16.msra.mxu0 0
        %862 = vmatprep.subr.bf16.mxu0 0
        %863 = vmatpush2.bf16.msra.mxu0 0
        %864 = vmatprep.mubr.bf16.mxu0 0
        %865 = vmatmul.mubr.bf16.gmra.mxu0 %v830
        %v866 = vpop.f32.mrf.mxu0
        %v867 = vadd.f32 0.0, %v866
        %v868 = vpop.f32.mrf.mxu0
        %v869 = vpop.f32.mrf.mxu0
        %v870 = vpop.f32.mrf.mxu0
        %871 = vdwg.mxu0
        %v872 = vrcp.pop %v823
        %v873 = vmul.f32 %v867, %v872
        %v874 = vpack.c.bf16 %v873, %v873
        %v875 = vld [vmem:[#allocation7] sm:$0xf]
        %v876 = vld [vmem:[#allocation7 + $0x4] sm:$0xf]
        %v877 = vld [vmem:[#allocation7 + $0x8] sm:$0xf]
        %v878 = vld [vmem:[#allocation7 + $0xc] sm:$0xf]
        %v879 = vld [vmem:[#allocation7 + $0x10] sm:$0xf]
        %v880 = vld [vmem:[#allocation7 + $0x14] sm:$0xf]
        %v881 = vld [vmem:[#allocation7 + $0x18] sm:$0xf]
        %v882 = vld [vmem:[#allocation7 + $0x1c] sm:$0xf]
        %v883 = vld [vmem:[#allocation9] sm:$0x1]
        %v885 = vlaneseq
        %v886 = vshrl.u32 %v885, 7
        %v887 = vsub.s32 0, %v886
        %v888 = vrot.slane %v883, %v887
        %v898 = vunpack.c.l.b16 %v875
        %v899 = vunpack.c.l.b16 %v876
        %v900 = vunpack.c.l.b16 %v877
        %v901 = vunpack.c.l.b16 %v878
        %v902 = vunpack.c.l.b16 %v879
        %v903 = vunpack.c.l.b16 %v880
        %v904 = vunpack.c.l.b16 %v881
        %v905 = vunpack.c.l.b16 %v882
        %v906 = vpack.c.b16 %v899, %v898
        %v907 = vpack.c.b16 %v901, %v900
        %v908 = vpack.c.b16 %v903, %v902
        %v909 = vpack.c.b16 %v905, %v904
        %v915 = vsel %vm767, %v874, 0
        %917 = vmatprep.subr.bf16.mxu0 0
        %918 = vmatpush1.bf16.msra.mxu0 0
        %919 = vmatprep.subr.bf16.mxu0 0
        %920 = vmatpush1.bf16.msra.mxu0 0
        %921 = vmatprep.subr.bf16.mxu0 0
        %922 = vmatpush1.bf16.msra.mxu0 0
        %923 = vmatprep.subr.bf16.mxu0 0
        %924 = vmatpush1.bf16.msra.mxu0 0
        %925 = vmatprep.subr.bf16.mxu0 0
        %926 = vmatpush1.bf16.msra.mxu0 %v909
        %927 = vmatprep.subr.bf16.mxu0 0
        %928 = vmatpush1.bf16.msra.mxu0 %v908
        %929 = vmatprep.subr.bf16.mxu0 0
        %930 = vmatpush1.bf16.msra.mxu0 %v907
        %931 = vmatprep.subr.bf16.mxu0 0
        %932 = vmatpush1.bf16.msra.mxu0 %v906
        %933 = vmatprep.subr.bf16.mxu0 0
        %934 = vmatpush2.bf16.msra.mxu0 0
        %935 = vmatprep.subr.bf16.mxu0 0
        %936 = vmatpush2.bf16.msra.mxu0 0
        %937 = vmatprep.subr.bf16.mxu0 0
        %938 = vmatpush2.bf16.msra.mxu0 0
        %939 = vmatprep.subr.bf16.mxu0 0
        %940 = vmatpush2.bf16.msra.mxu0 0
        %941 = vmatprep.subr.bf16.mxu0 0
        %942 = vmatpush2.bf16.msra.mxu0 0
        %943 = vmatprep.subr.bf16.mxu0 0
        %944 = vmatpush2.bf16.msra.mxu0 0
        %945 = vmatprep.subr.bf16.mxu0 0
        %946 = vmatpush2.bf16.msra.mxu0 0
        %947 = vmatprep.subr.bf16.mxu0 0
        %948 = vmatpush2.bf16.msra.mxu0 0
        %949 = vmatprep.mubr.bf16.mxu0 0
        %950 = vmatmul.mubr.bf16.gmra.mxu0 %v915
        %v951 = vpop.f32.mrf.mxu0
        %v952 = vadd.f32 %v888, %v951
        %v953 = vpop.f32.mrf.mxu0
        %v954 = vpop.f32.mrf.mxu0
        %v955 = vpop.f32.mrf.mxu0
        %956 = vdwg.mxu0
        %v957 = vld [vmem:[%s631] sm:$0xff]
        %v958 = vpack.c.bf16 %v957, %v957
        %v959 = vld [vmem:[#allocation15] sm:$0xf]
        %v960 = vld [vmem:[#allocation15 + $0x4] sm:$0xf]
        %v961 = vld [vmem:[%s12] sm:$0x1]
        %v963 = vlaneseq
        %v964 = vshrl.u32 %v963, 7
        %v965 = vsub.s32 0, %v964
        %v966 = vrot.slane %v961, %v965
        %v970 = vunpack.c.l.b16 %v959
        %v971 = vunpack.c.l.b16 %v960
        %v972 = vpack.c.b16 %v971, %v970
        %v975 = vsel %vm814, %v958, 0
        %977 = vmatprep.subr.bf16.mxu0 0
        %978 = vmatpush1.bf16.msra.mxu0 0
        %979 = vmatprep.subr.bf16.mxu0 0
        %980 = vmatpush1.bf16.msra.mxu0 0
        %981 = vmatprep.subr.bf16.mxu0 0
        %982 = vmatpush1.bf16.msra.mxu0 0
        %983 = vmatprep.subr.bf16.mxu0 0
        %984 = vmatpush1.bf16.msra.mxu0 0
        %985 = vmatprep.subr.bf16.mxu0 0
        %986 = vmatpush1.bf16.msra.mxu0 0
        %987 = vmatprep.subr.bf16.mxu0 0
        %988 = vmatpush1.bf16.msra.mxu0 0
        %989 = vmatprep.subr.bf16.mxu0 0
        %990 = vmatpush1.bf16.msra.mxu0 0
        %991 = vmatprep.subr.bf16.mxu0 0
        %992 = vmatpush1.bf16.msra.mxu0 %v972
        %993 = vmatprep.subr.bf16.mxu0 0
        %994 = vmatpush2.bf16.msra.mxu0 0
        %995 = vmatprep.subr.bf16.mxu0 0
        %996 = vmatpush2.bf16.msra.mxu0 0
        %997 = vmatprep.subr.bf16.mxu0 0
        %998 = vmatpush2.bf16.msra.mxu0 0
        %999 = vmatprep.subr.bf16.mxu0 0
        %1000 = vmatpush2.bf16.msra.mxu0 0
        %1001 = vmatprep.subr.bf16.mxu0 0
        %1002 = vmatpush2.bf16.msra.mxu0 0
        %1003 = vmatprep.subr.bf16.mxu0 0
        %1004 = vmatpush2.bf16.msra.mxu0 0
        %1005 = vmatprep.subr.bf16.mxu0 0
        %1006 = vmatpush2.bf16.msra.mxu0 0
        %1007 = vmatprep.subr.bf16.mxu0 0
        %1008 = vmatpush2.bf16.msra.mxu0 0
        %1009 = vmatprep.mubr.bf16.mxu0 0
        %1010 = vmatmul.mubr.bf16.gmra.mxu0 %v975
        %v1011 = vpop.f32.mrf.mxu0
        %v1012 = vadd.f32 %v966, %v1011
        %v1013 = vpop.f32.mrf.mxu0
        %v1014 = vpop.f32.mrf.mxu0
        %v1015 = vpop.f32.mrf.mxu0
        %1016 = vdwg.mxu0
        %v1017 = vpack.c.bf16 %v952, %v952
        %v1018 = vld [vmem:[%s6] sm:$0xff]
        %v1019 = vld [vmem:[%s6 + $0x8] sm:$0xff]
        %v1020 = vld [vmem:[%s6 + $0x10] sm:$0xff]
        %v1021 = vld [vmem:[%s6 + $0x18] sm:$0xff]
        %v1022 = vld [vmem:[%s6 + $0x20] sm:$0xff]
        %v1023 = vld [vmem:[%s6 + $0x28] sm:$0xff]
        %v1024 = vld [vmem:[%s6 + $0x30] sm:$0xff]
        %v1025 = vld [vmem:[%s6 + $0x38] sm:$0xff]
        %v1026 = vld [vmem:[#allocation10] sm:$0x3]
        %v1028 = vlaneseq
        %v1029 = vshrl.u32 %v1028, 7
        %v1030 = vsub.s32 0, %v1029
        %v1031 = vrot.slane %v1026, %v1030
        %v1032 = vlaneseq
        %v1033 = vshrl.u32 %v1032, 7
        %v1034 = vsub.s32 1, %v1033
        %v1035 = vrot.slane %v1026, %v1034
        %v1046 = vunpack.c.l.b16 %v1018
        %v1047 = vunpack.c.h.b16 %v1018
        %v1048 = vunpack.c.l.b16 %v1019
        %v1049 = vunpack.c.h.b16 %v1019
        %v1050 = vunpack.c.l.b16 %v1020
        %v1051 = vunpack.c.h.b16 %v1020
        %v1052 = vunpack.c.l.b16 %v1021
        %v1053 = vunpack.c.h.b16 %v1021
        %v1054 = vunpack.c.l.b16 %v1022
        %v1055 = vunpack.c.h.b16 %v1022
        %v1056 = vunpack.c.l.b16 %v1023
        %v1057 = vunpack.c.h.b16 %v1023
        %v1058 = vunpack.c.l.b16 %v1024
        %v1059 = vunpack.c.h.b16 %v1024
        %v1060 = vunpack.c.l.b16 %v1025
        %v1061 = vunpack.c.h.b16 %v1025
        %v1062 = vpack.c.b16 %v1048, %v1046
        %v1063 = vpack.c.b16 %v1049, %v1047
        %v1064 = vpack.c.b16 %v1052, %v1050
        %v1065 = vpack.c.b16 %v1053, %v1051
        %v1066 = vpack.c.b16 %v1056, %v1054
        %v1067 = vpack.c.b16 %v1057, %v1055
        %v1068 = vpack.c.b16 %v1060, %v1058
        %v1069 = vpack.c.b16 %v1061, %v1059
        %v1079 = vsel %vm767, %v1017, 0
        %1081 = vmatprep.subr.bf16.mxu0 0
        %1082 = vmatpush1.bf16.msra.mxu0 0
        %1083 = vmatprep.subr.bf16.mxu0 0
        %1084 = vmatpush1.bf16.msra.mxu0 0
        %1085 = vmatprep.subr.bf16.mxu0 0
        %1086 = vmatpush1.bf16.msra.mxu0 0
        %1087 = vmatprep.subr.bf16.mxu0 0
        %1088 = vmatpush1.bf16.msra.mxu0 0
        %1089 = vmatprep.subr.bf16.mxu0 %v1069
        %1090 = vmatpush1.bf16.msra.mxu0 %v1068
        %1091 = vmatprep.subr.bf16.mxu0 %v1067
        %1092 = vmatpush1.bf16.msra.mxu0 %v1066
        %1093 = vmatprep.subr.bf16.mxu0 %v1065
        %1094 = vmatpush1.bf16.msra.mxu0 %v1064
        %1095 = vmatprep.subr.bf16.mxu0 %v1063
        %1096 = vmatpush1.bf16.msra.mxu0 %v1062
        %1097 = vmatprep.subr.bf16.mxu0 0
        %1098 = vmatpush2.bf16.msra.mxu0 0
        %1099 = vmatprep.subr.bf16.mxu0 0
        %1100 = vmatpush2.bf16.msra.mxu0 0
        %1101 = vmatprep.subr.bf16.mxu0 0
        %1102 = vmatpush2.bf16.msra.mxu0 0
        %1103 = vmatprep.subr.bf16.mxu0 0
        %1104 = vmatpush2.bf16.msra.mxu0 0
        %1105 = vmatprep.subr.bf16.mxu0 0
        %1106 = vmatpush2.bf16.msra.mxu0 0
        %1107 = vmatprep.subr.bf16.mxu0 0
        %1108 = vmatpush2.bf16.msra.mxu0 0
        %1109 = vmatprep.subr.bf16.mxu0 0
        %1110 = vmatpush2.bf16.msra.mxu0 0
        %1111 = vmatprep.subr.bf16.mxu0 0
        %1112 = vmatpush2.bf16.msra.mxu0 0
        %1113 = vmatprep.mubr.bf16.mxu0 0
        %1114 = vmatmul.mubr.bf16.gmra.mxu0 %v1079
        %v1115 = vpop.f32.mrf.mxu0
        %v1116 = vadd.f32 %v1031, %v1115
        %v1117 = vpop.f32.mrf.mxu0
        %v1118 = vadd.f32 %v1035, %v1117
        %v1119 = vpop.f32.mrf.mxu0
        %v1120 = vpop.f32.mrf.mxu0
        %1121 = vdwg.mxu0
        %v1122 = vpack.c.bf16 %v1116, %v1116
        %1124 = vrot.lane.b32.xlu0 %v1122, 64
        %v1125 = vpop.permute.xlu0 %1124
        %v1127 = vsel %vm767, %v1122, 0
        %v1130 = vsel %vm767, %v1125, 0
        %1132 = vmatprep.subr.bf16.mxu0 0
        %1133 = vmatpush1.bf16.xpose.msra.mxu0 0
        %1134 = vmatprep.subr.bf16.mxu0 0
        %1135 = vmatpush1.bf16.xpose.msra.mxu0 0
        %1136 = vmatprep.subr.bf16.mxu0 0
        %1137 = vmatpush1.bf16.xpose.msra.mxu0 0
        %1138 = vmatprep.subr.bf16.mxu0 0
        %1139 = vmatpush1.bf16.xpose.msra.mxu0 0
        %1140 = vmatprep.subr.bf16.mxu0 0
        %1141 = vmatpush1.bf16.xpose.msra.mxu0 0
        %1142 = vmatprep.subr.bf16.mxu0 0
        %1143 = vmatpush1.bf16.xpose.msra.mxu0 0
        %1144 = vmatprep.subr.bf16.mxu0 0
        %1145 = vmatpush1.bf16.xpose.msra.mxu0 0
        %1146 = vmatprep.subr.bf16.mxu0 0
        %1147 = vmatpush1.bf16.xpose.msra.mxu0 %v1130
        %1148 = vmatprep.subr.bf16.mxu0 0
        %1149 = vmatpush2.bf16.xpose.msra.mxu0 0
        %1150 = vmatprep.subr.bf16.mxu0 0
        %1151 = vmatpush2.bf16.xpose.msra.mxu0 0
        %1152 = vmatprep.subr.bf16.mxu0 0
        %1153 = vmatpush2.bf16.xpose.msra.mxu0 0
        %1154 = vmatprep.subr.bf16.mxu0 0
        %1155 = vmatpush2.bf16.xpose.msra.mxu0 0
        %1156 = vmatprep.subr.bf16.mxu0 0
        %1157 = vmatpush2.bf16.xpose.msra.mxu0 0
        %1158 = vmatprep.subr.bf16.mxu0 0
        %1159 = vmatpush2.bf16.xpose.msra.mxu0 0
        %1160 = vmatprep.subr.bf16.mxu0 0
        %1161 = vmatpush2.bf16.xpose.msra.mxu0 0
        %1162 = vmatprep.subr.bf16.mxu0 0
        %1163 = vmatpush2.bf16.xpose.msra.mxu0 0
        %1164 = vmatprep.mubr.bf16.mxu0 0
        %1165 = vmatmul.mubr.bf16.gmra.mxu0 %v1127
        %v1166 = vpop.f32.mrf.mxu0
        %v1167 = vadd.f32 0.0, %v1166
        %v1168 = vpop.f32.mrf.mxu0
        %v1169 = vpop.f32.mrf.mxu0
        %v1170 = vpop.f32.mrf.mxu0
        %1171 = vdwg.mxu0
        %v1172 = vsel %vm715, %v1167, -inf
        %1173 = vmax.xlane.f32.xlu0 %v1172
        %v1174 = vpop.xlane.xlu0 %1173
        %v1175 = vsub.f32 %v1167, %v1174
        %v1176 = vmul.f32 %v1175, 1.442695
        %v1177 = vpow.pop %v1176
        %v1178 = vsel %vm715, %v1177, 0.0
        %1179 = vadd.xlane.f32.xlu0 %v1178
        %v1180 = vpop.xlane.xlu0 %1179
        %v1181 = vpack.c.bf16 %v1177, %v1177
        %v1182 = vpack.c.bf16 %v1118, %v1118
        %v1184 = vsel %vm715, %v1181, 0
        %v1187 = vsel %vm719, %v1182, 0
        %1189 = vmatprep.subr.bf16.mxu0 0
        %1190 = vmatpush1.bf16.msra.mxu0 0
        %1191 = vmatprep.subr.bf16.mxu0 0
        %1192 = vmatpush1.bf16.msra.mxu0 0
        %1193 = vmatprep.subr.bf16.mxu0 0
        %1194 = vmatpush1.bf16.msra.mxu0 0
        %1195 = vmatprep.subr.bf16.mxu0 0
        %1196 = vmatpush1.bf16.msra.mxu0 0
        %1197 = vmatprep.subr.bf16.mxu0 0
        %1198 = vmatpush1.bf16.msra.mxu0 0
        %1199 = vmatprep.subr.bf16.mxu0 0
        %1200 = vmatpush1.bf16.msra.mxu0 0
        %1201 = vmatprep.subr.bf16.mxu0 0
        %1202 = vmatpush1.bf16.msra.mxu0 0
        %1203 = vmatprep.subr.bf16.mxu0 0
        %1204 = vmatpush1.bf16.msra.mxu0 %v1187
        %1205 = vmatprep.subr.bf16.mxu0 0
        %1206 = vmatpush2.bf16.msra.mxu0 0
        %1207 = vmatprep.subr.bf16.mxu0 0
        %1208 = vmatpush2.bf16.msra.mxu0 0
        %1209 = vmatprep.subr.bf16.mxu0 0
        %1210 = vmatpush2.bf16.msra.mxu0 0
        %1211 = vmatprep.subr.bf16.mxu0 0
        %1212 = vmatpush2.bf16.msra.mxu0 0
        %1213 = vmatprep.subr.bf16.mxu0 0
        %1214 = vmatpush2.bf16.msra.mxu0 0
        %1215 = vmatprep.subr.bf16.mxu0 0
        %1216 = vmatpush2.bf16.msra.mxu0 0
        %1217 = vmatprep.subr.bf16.mxu0 0
        %1218 = vmatpush2.bf16.msra.mxu0 0
        %1219 = vmatprep.subr.bf16.mxu0 0
        %1220 = vmatpush2.bf16.msra.mxu0 0
        %1221 = vmatprep.mubr.bf16.mxu0 0
        %1222 = vmatmul.mubr.bf16.gmra.mxu0 %v1184
        %v1223 = vpop.f32.mrf.mxu0
        %v1224 = vadd.f32 0.0, %v1223
        %v1225 = vpop.f32.mrf.mxu0
        %v1226 = vpop.f32.mrf.mxu0
        %v1227 = vpop.f32.mrf.mxu0
        %1228 = vdwg.mxu0
        %v1229 = vrcp.pop %v1180
        %v1230 = vmul.f32 %v1224, %v1229
        %v1231 = vpack.c.bf16 %v1230, %v1230
        %v1232 = vld [vmem:[%s8] sm:$0xf]
        %v1233 = vld [vmem:[%s8 + $0x4] sm:$0xf]
        %v1234 = vld [vmem:[%s8 + $0x8] sm:$0xf]
        %v1235 = vld [vmem:[%s8 + $0xc] sm:$0xf]
        %v1236 = vld [vmem:[%s8 + $0x10] sm:$0xf]
        %v1237 = vld [vmem:[%s8 + $0x14] sm:$0xf]
        %v1238 = vld [vmem:[%s8 + $0x18] sm:$0xf]
        %v1239 = vld [vmem:[%s8 + $0x1c] sm:$0xf]
        %v1240 = vld [vmem:[#allocation12] sm:$0x1]
        %v1242 = vlaneseq
        %v1243 = vshrl.u32 %v1242, 7
        %v1244 = vsub.s32 0, %v1243
        %v1245 = vrot.slane %v1240, %v1244
        %v1255 = vunpack.c.l.b16 %v1232
        %v1256 = vunpack.c.l.b16 %v1233
        %v1257 = vunpack.c.l.b16 %v1234
        %v1258 = vunpack.c.l.b16 %v1235
        %v1259 = vunpack.c.l.b16 %v1236
        %v1260 = vunpack.c.l.b16 %v1237
        %v1261 = vunpack.c.l.b16 %v1238
        %v1262 = vunpack.c.l.b16 %v1239
        %v1263 = vpack.c.b16 %v1256, %v1255
        %v1264 = vpack.c.b16 %v1258, %v1257
        %v1265 = vpack.c.b16 %v1260, %v1259
        %v1266 = vpack.c.b16 %v1262, %v1261
        %v1272 = vsel %vm767, %v1231, 0
        %1274 = vmatprep.subr.bf16.mxu0 0
        %1275 = vmatpush1.bf16.msra.mxu0 0
        %1276 = vmatprep.subr.bf16.mxu0 0
        %1277 = vmatpush1.bf16.msra.mxu0 0
        %1278 = vmatprep.subr.bf16.mxu0 0
        %1279 = vmatpush1.bf16.msra.mxu0 0
        %1280 = vmatprep.subr.bf16.mxu0 0
        %1281 = vmatpush1.bf16.msra.mxu0 0
        %1282 = vmatprep.subr.bf16.mxu0 0
        %1283 = vmatpush1.bf16.msra.mxu0 %v1266
        %1284 = vmatprep.subr.bf16.mxu0 0
        %1285 = vmatpush1.bf16.msra.mxu0 %v1265
        %1286 = vmatprep.subr.bf16.mxu0 0
        %1287 = vmatpush1.bf16.msra.mxu0 %v1264
        %1288 = vmatprep.subr.bf16.mxu0 0
        %1289 = vmatpush1.bf16.msra.mxu0 %v1263
        %1290 = vmatprep.subr.bf16.mxu0 0
        %1291 = vmatpush2.bf16.msra.mxu0 0
        %1292 = vmatprep.subr.bf16.mxu0 0
        %1293 = vmatpush2.bf16.msra.mxu0 0
        %1294 = vmatprep.subr.bf16.mxu0 0
        %1295 = vmatpush2.bf16.msra.mxu0 0
        %1296 = vmatprep.subr.bf16.mxu0 0
        %1297 = vmatpush2.bf16.msra.mxu0 0
        %1298 = vmatprep.subr.bf16.mxu0 0
        %1299 = vmatpush2.bf16.msra.mxu0 0
        %1300 = vmatprep.subr.bf16.mxu0 0
        %1301 = vmatpush2.bf16.msra.mxu0 0
        %1302 = vmatprep.subr.bf16.mxu0 0
        %1303 = vmatpush2.bf16.msra.mxu0 0
        %1304 = vmatprep.subr.bf16.mxu0 0
        %1305 = vmatpush2.bf16.msra.mxu0 0
        %1306 = vmatprep.mubr.bf16.mxu0 0
        %1307 = vmatmul.mubr.bf16.gmra.mxu0 %v1272
        %v1308 = vpop.f32.mrf.mxu0
        %v1309 = vadd.f32 %v1245, %v1308
        %v1310 = vpop.f32.mrf.mxu0
        %v1311 = vpop.f32.mrf.mxu0
        %v1312 = vpop.f32.mrf.mxu0
        %1313 = vdwg.mxu0
        %v1314 = vadd.f32 %v952, %v1309
        %v1315 = vpack.c.bf16 %v1314, %v1314
        %v1316 = vld [vmem:[#allocation16] sm:$0xf]
        %v1317 = vld [vmem:[#allocation16 + $0x4] sm:$0xf]
        %v1318 = vld [vmem:[#allocation16 + $0x8] sm:$0xf]
        %v1319 = vld [vmem:[#allocation16 + $0xc] sm:$0xf]
        %v1320 = vld [vmem:[#allocation16 + $0x10] sm:$0xf]
        %v1321 = vld [vmem:[#allocation16 + $0x14] sm:$0xf]
        %v1322 = vld [vmem:[#allocation16 + $0x18] sm:$0xf]
        %v1323 = vld [vmem:[#allocation16 + $0x1c] sm:$0xf]
        %v1324 = vld [vmem:[%s14] sm:$0x1]
        %v1326 = vlaneseq
        %v1327 = vshrl.u32 %v1326, 7
        %v1328 = vsub.s32 0, %v1327
        %v1329 = vrot.slane %v1324, %v1328
        %v1339 = vunpack.c.l.b16 %v1316
        %v1340 = vunpack.c.l.b16 %v1317
        %v1341 = vunpack.c.l.b16 %v1318
        %v1342 = vunpack.c.l.b16 %v1319
        %v1343 = vunpack.c.l.b16 %v1320
        %v1344 = vunpack.c.l.b16 %v1321
        %v1345 = vunpack.c.l.b16 %v1322
        %v1346 = vunpack.c.l.b16 %v1323
        %v1347 = vpack.c.b16 %v1340, %v1339
        %v1348 = vpack.c.b16 %v1342, %v1341
        %v1349 = vpack.c.b16 %v1344, %v1343
        %v1350 = vpack.c.b16 %v1346, %v1345
        %v1356 = vsel %vm767, %v1315, 0
        %1358 = vmatprep.subr.bf16.mxu0 0
        %1359 = vmatpush1.bf16.msra.mxu0 0
        %1360 = vmatprep.subr.bf16.mxu0 0
        %1361 = vmatpush1.bf16.msra.mxu0 0
        %1362 = vmatprep.subr.bf16.mxu0 0
        %1363 = vmatpush1.bf16.msra.mxu0 0
        %1364 = vmatprep.subr.bf16.mxu0 0
        %1365 = vmatpush1.bf16.msra.mxu0 0
        %1366 = vmatprep.subr.bf16.mxu0 0
        %1367 = vmatpush1.bf16.msra.mxu0 %v1350
        %1368 = vmatprep.subr.bf16.mxu0 0
        %1369 = vmatpush1.bf16.msra.mxu0 %v1349
        %1370 = vmatprep.subr.bf16.mxu0 0
        %1371 = vmatpush1.bf16.msra.mxu0 %v1348
        %1372 = vmatprep.subr.bf16.mxu0 0
        %1373 = vmatpush1.bf16.msra.mxu0 %v1347
        %1374 = vmatprep.subr.bf16.mxu0 0
        %1375 = vmatpush2.bf16.msra.mxu0 0
        %1376 = vmatprep.subr.bf16.mxu0 0
        %1377 = vmatpush2.bf16.msra.mxu0 0
        %1378 = vmatprep.subr.bf16.mxu0 0
        %1379 = vmatpush2.bf16.msra.mxu0 0
        %1380 = vmatprep.subr.bf16.mxu0 0
        %1381 = vmatpush2.bf16.msra.mxu0 0
        %1382 = vmatprep.subr.bf16.mxu0 0
        %1383 = vmatpush2.bf16.msra.mxu0 0
        %1384 = vmatprep.subr.bf16.mxu0 0
        %1385 = vmatpush2.bf16.msra.mxu0 0
        %1386 = vmatprep.subr.bf16.mxu0 0
        %1387 = vmatpush2.bf16.msra.mxu0 0
        %1388 = vmatprep.subr.bf16.mxu0 0
        %1389 = vmatpush2.bf16.msra.mxu0 0
        %1390 = vmatprep.mubr.bf16.mxu0 0
        %1391 = vmatmul.mubr.bf16.gmra.mxu0 %v1356
        %v1392 = vpop.f32.mrf.mxu0
        %v1393 = vadd.f32 %v1329, %v1392
        %v1394 = vpop.f32.mrf.mxu0
        %v1395 = vpop.f32.mrf.mxu0
        %v1396 = vpop.f32.mrf.mxu0
        %1397 = vdwg.mxu0
        %v1398 = vpack.c.bf16 %v1012, %v1012
        %v1399 = vpack.c.bf16 %v1393, %v1393
        %v1401 = vsel %vm767, %v1398, 0
        %v1404 = vsel %vm767, %v1399, 0
        %1406 = vmatprep.subr.bf16.mxu0 0
        %1407 = vmatpush1.bf16.xpose.msra.mxu0 0
        %1408 = vmatprep.subr.bf16.mxu0 0
        %1409 = vmatpush1.bf16.xpose.msra.mxu0 0
        %1410 = vmatprep.subr.bf16.mxu0 0
        %1411 = vmatpush1.bf16.xpose.msra.mxu0 0
        %1412 = vmatprep.subr.bf16.mxu0 0
        %1413 = vmatpush1.bf16.xpose.msra.mxu0 0
        %1414 = vmatprep.subr.bf16.mxu0 0
        %1415 = vmatpush1.bf16.xpose.msra.mxu0 0
        %1416 = vmatprep.subr.bf16.mxu0 0
        %1417 = vmatpush1.bf16.xpose.msra.mxu0 0
        %1418 = vmatprep.subr.bf16.mxu0 0
        %1419 = vmatpush1.bf16.xpose.msra.mxu0 0
        %1420 = vmatprep.subr.bf16.mxu0 0
        %1421 = vmatpush1.bf16.xpose.msra.mxu0 %v1404
        %1422 = vmatprep.subr.bf16.mxu0 0
        %1423 = vmatpush2.bf16.xpose.msra.mxu0 0
        %1424 = vmatprep.subr.bf16.mxu0 0
        %1425 = vmatpush2.bf16.xpose.msra.mxu0 0
        %1426 = vmatprep.subr.bf16.mxu0 0
        %1427 = vmatpush2.bf16.xpose.msra.mxu0 0
        %1428 = vmatprep.subr.bf16.mxu0 0
        %1429 = vmatpush2.bf16.xpose.msra.mxu0 0
        %1430 = vmatprep.subr.bf16.mxu0 0
        %1431 = vmatpush2.bf16.xpose.msra.mxu0 0
        %1432 = vmatprep.subr.bf16.mxu0 0
        %1433 = vmatpush2.bf16.xpose.msra.mxu0 0
        %1434 = vmatprep.subr.bf16.mxu0 0
        %1435 = vmatpush2.bf16.xpose.msra.mxu0 0
        %1436 = vmatprep.subr.bf16.mxu0 0
        %1437 = vmatpush2.bf16.xpose.msra.mxu0 0
        %1438 = vmatprep.mubr.bf16.mxu0 0
        %1439 = vmatmul.mubr.bf16.gmra.mxu0 %v1401
        %v1440 = vpop.f32.mrf.mxu0
        %v1441 = vadd.f32 0.0, %v1440
        %v1442 = vpop.f32.mrf.mxu0
        %v1443 = vpop.f32.mrf.mxu0
        %v1444 = vpop.f32.mrf.mxu0
        %1445 = vdwg.mxu0
        %v1446 = vsel %vm715, %v1441, -inf
        %1447 = vmax.xlane.f32.xlu0 %v1446
        %v1448 = vpop.xlane.xlu0 %1447
        %v1449 = vsub.f32 %v1441, %v1448
        %v1450 = vmul.f32 %v1449, 1.442695
        %v1451 = vpow.pop %v1450
        %v1452 = vsel %vm715, %v1451, 0.0
        %1453 = vadd.xlane.f32.xlu0 %v1452
        %v1454 = vpop.xlane.xlu0 %1453
        %v1455 = vpack.c.bf16 %v1451, %v1451
        %1457 = vrot.lane.b32.xlu0 %v1399, 64
        %v1458 = vpop.permute.xlu0 %1457
        %v1460 = vsel %vm715, %v1455, 0
        %v1463 = vsel %vm719, %v1458, 0
        %1465 = vmatprep.subr.bf16.mxu0 0
        %1466 = vmatpush1.bf16.msra.mxu0 0
        %1467 = vmatprep.subr.bf16.mxu0 0
        %1468 = vmatpush1.bf16.msra.mxu0 0
        %1469 = vmatprep.subr.bf16.mxu0 0
        %1470 = vmatpush1.bf16.msra.mxu0 0
        %1471 = vmatprep.subr.bf16.mxu0 0
        %1472 = vmatpush1.bf16.msra.mxu0 0
        %1473 = vmatprep.subr.bf16.mxu0 0
        %1474 = vmatpush1.bf16.msra.mxu0 0
        %1475 = vmatprep.subr.bf16.mxu0 0
        %1476 = vmatpush1.bf16.msra.mxu0 0
        %1477 = vmatprep.subr.bf16.mxu0 0
        %1478 = vmatpush1.bf16.msra.mxu0 0
        %1479 = vmatprep.subr.bf16.mxu0 0
        %1480 = vmatpush1.bf16.msra.mxu0 %v1463
        %1481 = vmatprep.subr.bf16.mxu0 0
        %1482 = vmatpush2.bf16.msra.mxu0 0
        %1483 = vmatprep.subr.bf16.mxu0 0
        %1484 = vmatpush2.bf16.msra.mxu0 0
        %1485 = vmatprep.subr.bf16.mxu0 0
        %1486 = vmatpush2.bf16.msra.mxu0 0
        %1487 = vmatprep.subr.bf16.mxu0 0
        %1488 = vmatpush2.bf16.msra.mxu0 0
        %1489 = vmatprep.subr.bf16.mxu0 0
        %1490 = vmatpush2.bf16.msra.mxu0 0
        %1491 = vmatprep.subr.bf16.mxu0 0
        %1492 = vmatpush2.bf16.msra.mxu0 0
        %1493 = vmatprep.subr.bf16.mxu0 0
        %1494 = vmatpush2.bf16.msra.mxu0 0
        %1495 = vmatprep.subr.bf16.mxu0 0
        %1496 = vmatpush2.bf16.msra.mxu0 0
        %1497 = vmatprep.mubr.bf16.mxu0 0
        %1498 = vmatmul.mubr.bf16.gmra.mxu0 %v1460
        %v1499 = vpop.f32.mrf.mxu0
        %v1500 = vadd.f32 0.0, %v1499
        %v1501 = vpop.f32.mrf.mxu0
        %v1502 = vpop.f32.mrf.mxu0
        %v1503 = vpop.f32.mrf.mxu0
        %1504 = vdwg.mxu0
        %v1505 = vrcp.pop %v1454
        %v1506 = vmul.f32 %v1500, %v1505
        %v1507 = vpack.c.bf16 %v1506, %v1506
        %v1508 = vld [vmem:[%s15] sm:$0xf]
        %v1509 = vld [vmem:[%s15 + $0x4] sm:$0xf]
        %v1510 = vld [vmem:[%s15 + $0x8] sm:$0xf]
        %v1511 = vld [vmem:[%s15 + $0xc] sm:$0xf]
        %v1512 = vld [vmem:[%s15 + $0x10] sm:$0xf]
        %v1513 = vld [vmem:[%s15 + $0x14] sm:$0xf]
        %v1514 = vld [vmem:[%s15 + $0x18] sm:$0xf]
        %v1515 = vld [vmem:[%s15 + $0x1c] sm:$0xf]
        %v1516 = vld [vmem:[%s16] sm:$0x1]
        %v1518 = vlaneseq
        %v1519 = vshrl.u32 %v1518, 7
        %v1520 = vsub.s32 0, %v1519
        %v1521 = vrot.slane %v1516, %v1520
        %v1531 = vunpack.c.l.b16 %v1508
        %v1532 = vunpack.c.l.b16 %v1509
        %v1533 = vunpack.c.l.b16 %v1510
        %v1534 = vunpack.c.l.b16 %v1511
        %v1535 = vunpack.c.l.b16 %v1512
        %v1536 = vunpack.c.l.b16 %v1513
        %v1537 = vunpack.c.l.b16 %v1514
        %v1538 = vunpack.c.l.b16 %v1515
        %v1539 = vpack.c.b16 %v1532, %v1531
        %v1540 = vpack.c.b16 %v1534, %v1533
        %v1541 = vpack.c.b16 %v1536, %v1535
        %v1542 = vpack.c.b16 %v1538, %v1537
        %v1548 = vsel %vm767, %v1507, 0
        %1550 = vmatprep.subr.bf16.mxu0 0
        %1551 = vmatpush1.bf16.msra.mxu0 0
        %1552 = vmatprep.subr.bf16.mxu0 0
        %1553 = vmatpush1.bf16.msra.mxu0 0
        %1554 = vmatprep.subr.bf16.mxu0 0
        %1555 = vmatpush1.bf16.msra.mxu0 0
        %1556 = vmatprep.subr.bf16.mxu0 0
        %1557 = vmatpush1.bf16.msra.mxu0 0
        %1558 = vmatprep.subr.bf16.mxu0 0
        %1559 = vmatpush1.bf16.msra.mxu0 %v1542
        %1560 = vmatprep.subr.bf16.mxu0 0
        %1561 = vmatpush1.bf16.msra.mxu0 %v1541
        %1562 = vmatprep.subr.bf16.mxu0 0
        %1563 = vmatpush1.bf16.msra.mxu0 %v1540
        %1564 = vmatprep.subr.bf16.mxu0 0
        %1565 = vmatpush1.bf16.msra.mxu0 %v1539
        %1566 = vmatprep.subr.bf16.mxu0 0
        %1567 = vmatpush2.bf16.msra.mxu0 0
        %1568 = vmatprep.subr.bf16.mxu0 0
        %1569 = vmatpush2.bf16.msra.mxu0 0
        %1570 = vmatprep.subr.bf16.mxu0 0
        %1571 = vmatpush2.bf16.msra.mxu0 0
        %1572 = vmatprep.subr.bf16.mxu0 0
        %1573 = vmatpush2.bf16.msra.mxu0 0
        %1574 = vmatprep.subr.bf16.mxu0 0
        %1575 = vmatpush2.bf16.msra.mxu0 0
        %1576 = vmatprep.subr.bf16.mxu0 0
        %1577 = vmatpush2.bf16.msra.mxu0 0
        %1578 = vmatprep.subr.bf16.mxu0 0
        %1579 = vmatpush2.bf16.msra.mxu0 0
        %1580 = vmatprep.subr.bf16.mxu0 0
        %1581 = vmatpush2.bf16.msra.mxu0 0
        %1582 = vmatprep.mubr.bf16.mxu0 0
        %1583 = vmatmul.mubr.bf16.gmra.mxu0 %v1548
        %v1584 = vpop.f32.mrf.mxu0
        %v1585 = vadd.f32 %v1521, %v1584
        %v1586 = vpop.f32.mrf.mxu0
        %v1587 = vpop.f32.mrf.mxu0
        %v1588 = vpop.f32.mrf.mxu0
        %1589 = vdwg.mxu0
        %vm1590 = vcmask 31744
        %1591 = vst.msk [vmem:[%s702] sm:$0xff] %vm1590, %v1585
        %p1592 = scmp.lt.s32.totalorder %s36, 1
        %s1593 = scalar_select %p1592, %s36, 1
        %s1594 = smul.addr %s1593, 8
        %s1595 = scalar_lea.vmem %s17, %s1594
        // Predicated region
        $region129: #{tpu_custom_call.1} parent=87 // pred_check
          %p1596 = pneg %p421
        $region130: #{tpu_custom_call.1} parent=87 // pred_check_branch
          %1598 = sbr.rel (%p1596) target = $region132
        $region131: #{tpu_custom_call.1} parent=87 // pred_region
          _
        $region132: #{tpu_custom_call.1} parent=87 // pred_fallthru
          _
      $region88: #{tpu_custom_call.1} parent=5 // pred_fallthru
        _
      %p1599 = scmp.le.s32.totalorder 2, %s31
      // Predicated region
      $region133: #{tpu_custom_call.1} parent=5 // pred_check
        %p1600 = pneg %p1599
      $region134: #{tpu_custom_call.1} parent=5 // pred_check_branch
        %1602 = sbr.rel (%p1600) target = $region136
      $region135: #{tpu_custom_call.1} parent=5 // pred_region
        %s1603 = ssub.s32 %s31, 2
        // Predicated region
        $region137: #{tpu_custom_call.1} parent=135 // pred_check
          %p1604 = pneg %p427
        $region138: #{tpu_custom_call.1} parent=135 // pred_check_branch
          %1606 = sbr.rel (%p1604) target = $region140
        $region139: #{tpu_custom_call.1} parent=135 // pred_region
          %p1607 = scmp.lt.s32.totalorder %s37, 1
          %s1608 = scalar_select %p1607, %s37, 1
          %s1609 = smul.addr %s1608, 8
          %s1610 = scalar_lea.vmem %s17, %s1609
        $region140: #{tpu_custom_call.1} parent=135 // pred_fallthru
          _
      $region136: #{tpu_custom_call.1} parent=5 // pred_fallthru
        _
    $region6: #{tpu_custom_call.1} parent=1 // loop_footer
      %s35 = sadd.s32 1, %s31
    $region7: #{tpu_custom_call.1} parent=1 // loop_footer_branch
      %30 = sbr.rel target = $region3
    $region8: #{tpu_custom_call.1} parent=1 // loop_exit
      _
    %1611 = vsyncpa [#allocation3], 1
    %s1612 = scalar_lea.sflag [#allocation3], 1
    %1613 = vsyncpa %s1612, 1
    %1614 = vsyncpa [#allocation5], 1
    %1615 = vsyncpa [#allocation8], 1
    %1616 = vsyncpa [#allocation11], 1
    %1617 = vsyncpa [#allocation14], 1
    %s1618 = scalar_lea.sflag [#allocation14], 1
    %1619 = vsyncpa %s1618, 1
    %1620 = vsyncpa [#allocation17], 1

</llo_original>
